<compile_context>
chip_gen: v6e
topology: v6e:2x2x1
jax: 0.10.0
libtpu: 0.0.40
codegen_flags: <defaults>
</compile_context>

<pallas_src>
import functools

import jax
import jax.numpy as jnp
import numpy as np
from jax.experimental import pallas as pl
from jax.experimental.pallas import tpu as pltpu


# ----------------------------------------------------------------------------
# Fused Pallas kernel
# ----------------------------------------------------------------------------
def _res_block_kernel(x_ref, g1_ref, b1_ref, a1i_ref, a1o_ref, w1_ref,
                      g2_ref, b2_ref, a2i_ref, a2o_ref, w2_ref, o_ref, *, eps):
    """GN1+ReLU+Conv(k=3) -> GN2+ReLU+Conv(k=1) -> +residual for `bt` samples.

    x_ref  : (bt, L, Cp)    f32   input block (channels-last, zero-padded lanes)
    g1/b1  : (1, Cp)        f32   GN1 gamma/beta (padded channels = 0)
    a1i    : (Cp, 128)      f32   channel -> group mean (includes 1/(L*cg))
    a1o    : (128, Cp)      f32   group -> channel broadcast
    w1     : (3*Cp, RHp)    bf16  conv1 taps stacked along K ([l-1 | l | l+1])
    g2/b2  : (1, RHp)       f32   GN2 gamma/beta
    a2i    : (RHp, 128)     f32
    a2o    : (128, RHp)     f32
    w2     : (RHp, Hp)      bf16  1x1 conv
    o_ref  : (bt, L, Hp)    f32   output block (Hp == Cp)
    """
    x = x_ref[...]                                         # (bt, L, Cp) f32
    bt, L, Cp = x.shape
    RHp = w2_ref.shape[0]
    Hp = w2_ref.shape[1]

    # ---- GroupNorm 1 (two-pass stats, exact under zero channel padding) ----
    s1 = jnp.sum(x, axis=1)                                # (bt, Cp)
    mean1 = jnp.dot(jnp.dot(s1, a1i_ref[...], preferred_element_type=jnp.float32),
                    a1o_ref[...], preferred_element_type=jnp.float32)
    xc = x - mean1[:, None, :]
    var1 = jnp.dot(jnp.dot(jnp.sum(xc * xc, axis=1), a1i_ref[...],
                           preferred_element_type=jnp.float32),
                   a1o_ref[...], preferred_element_type=jnp.float32)
    scale1 = jax.lax.rsqrt(var1 + eps) * g1_ref[...]       # (bt, Cp)
    h = jnp.maximum(xc * scale1[:, None, :] + b1_ref[...], 0.0)   # (bt, L, Cp)

    # ---- Conv1d(k=3, pad=1) as one K=3*Cp bf16 MXU dot ---------------------
    hb = h.astype(jnp.bfloat16)                            # cast once
    zrow = jnp.zeros((bt, 1, Cp), jnp.bfloat16)
    hpad = jnp.concatenate([zrow, hb, zrow], axis=1)       # (bt, L+2, Cp)
    hcat = jnp.concatenate([hpad[:, 0:L, :],               # h[l-1]
                            hpad[:, 1:L + 1, :],           # h[l]
                            hpad[:, 2:L + 2, :]],          # h[l+1]
                           axis=-1)                        # (bt, L, 3*Cp) bf16
    h1 = jnp.dot(hcat.reshape(bt * L, 3 * Cp), w1_ref[...],
                 preferred_element_type=jnp.float32)       # (bt*L, RHp) f32
    h1 = h1.reshape(bt, L, RHp)

    # ---- GroupNorm 2 + ReLU + Conv1d(k=1) + residual -----------------------
    t1 = jnp.sum(h1, axis=1)                               # (bt, RHp)
    mean2 = jnp.dot(jnp.dot(t1, a2i_ref[...], preferred_element_type=jnp.float32),
                    a2o_ref[...], preferred_element_type=jnp.float32)
    hc = h1 - mean2[:, None, :]
    var2 = jnp.dot(jnp.dot(jnp.sum(hc * hc, axis=1), a2i_ref[...],
                           preferred_element_type=jnp.float32),
                   a2o_ref[...], preferred_element_type=jnp.float32)
    scale2 = jax.lax.rsqrt(var2 + eps) * g2_ref[...]
    a = jnp.maximum(hc * scale2[:, None, :] + b2_ref[...], 0.0).astype(jnp.bfloat16)
    y = jnp.dot(a.reshape(bt * L, RHp), w2_ref[...],
                preferred_element_type=jnp.float32)        # (bt*L, Hp) f32
    o_ref[...] = (y.reshape(bt, L, Hp) + x_ref[...]).astype(o_ref.dtype)


# ----------------------------------------------------------------------------
# Host-side helpers
# ----------------------------------------------------------------------------
def _round_up(n, m):
    return ((n + m - 1) // m) * m


def _group_matrices(c, groups, length, c_pad, g_pad=128):
    """Skinny indicator matrices replacing the dense (Cp,Cp) group-avg matrix.

    m_in  (c_pad, g_pad): per-channel sums @ m_in  -> per-group mean (1/(L*cg)).
    m_out (g_pad, c_pad): per-group mean  @ m_out -> broadcast back per channel.
    Padded channels/groups are all-zero, so padded lanes get mean=var=0.
    """
    cg = c // groups
    ch = np.arange(c)
    gid = ch // cg
    m_in = np.zeros((c_pad, g_pad), np.float32)
    m_in[ch, gid] = 1.0 / float(length * cg)
    m_out = np.zeros((g_pad, c_pad), np.float32)
    m_out[gid, ch] = 1.0
    return jnp.asarray(m_in), jnp.asarray(m_out)


def _pick_bt(B, L, Cp, RHp, Hp, budget_bytes=24 * 2**20):
    """Samples per grid step: target >=256 MXU rows, bounded by a VMEM budget."""
    per_sample = L * (2 * Cp * 4        # x block (double-buffered)
                      + 2 * Hp * 4      # out block (double-buffered)
                      + 2 * Cp * 4      # xc / h f32 temporaries
                      + 6 * Cp * 2      # bf16 taps + concatenated K tensor
                      + 2 * RHp * 4     # h1 / centered h1 (f32)
                      + RHp * 2)        # bf16 activations for the 1x1 conv
    bt = max(1, -(-256 // L))
    bt = min(bt, B)
    while bt > 1 and bt * per_sample > budget_bytes:
        bt -= 1
    # TODO(synk): for very large L even bt=1 may exceed the budget; needs the
    #             in-kernel two-phase (stats pass + normalize pass) GroupNorm.
    return bt, per_sample


# ----------------------------------------------------------------------------
# ImprovedResidualBlock forward (glue in JAX, compute in one Pallas kernel)
# ----------------------------------------------------------------------------
def improved_residual_block_forward(x_ncl, params, *, num_groups=8, eps=1e-5):
    B, C, L = x_ncl.shape
    w1 = params["conv1_w"]                       # (RH, C, 3)  PyTorch OIH
    w2 = params["conv2_w"]                       # (H,  RH, 1)
    RH, H = w1.shape[0], w2.shape[0]
    assert H == C, "residual add requires num_hiddens == in_channels"
    assert C % num_groups == 0 and RH % num_groups == 0
    assert num_groups <= 128

    Cp = _round_up(C, 128)
    RHp = _round_up(RH, 128)
    Hp = Cp

    bt, per_sample = _pick_bt(B, L, Cp, RHp, Hp)
    nb = -(-B // bt)
    Bp = nb * bt

    # ---- channels-last, lane padding, batch padding -------------------------
    x_nlc = jnp.transpose(x_ncl, (0, 2, 1))                      # (B, L, C)
    x_p = jnp.pad(x_nlc, ((0, Bp - B), (0, 0), (0, Cp - C)))     # (Bp, L, Cp)

    g1 = jnp.pad(params["gn1_w"], (0, Cp - C)).reshape(1, Cp).astype(jnp.float32)
    b1 = jnp.pad(params["gn1_b"], (0, Cp - C)).reshape(1, Cp).astype(jnp.float32)
    g2 = jnp.pad(params["gn2_w"], (0, RHp - RH)).reshape(1, RHp).astype(jnp.float32)
    b2 = jnp.pad(params["gn2_b"], (0, RHp - RH)).reshape(1, RHp).astype(jnp.float32)
    a1i, a1o = _group_matrices(C, num_groups, L, Cp)
    a2i, a2o = _group_matrices(RH, num_groups, L, RHp)

    # conv1 taps stacked along K: rows [tap(l-1) | tap(l) | tap(l+1)]
    w1m = jnp.transpose(w1, (2, 1, 0))                           # (3, C, RH)
    w1m = jnp.pad(w1m, ((0, 0), (0, Cp - C), (0, RHp - RH)))     # (3, Cp, RHp)
    w1s = w1m.reshape(3 * Cp, RHp).astype(jnp.bfloat16)
    w2m = jnp.pad(jnp.transpose(w2[:, :, 0], (1, 0)),
                  ((0, RHp - RH), (0, Hp - H))).astype(jnp.bfloat16)

    bytes_const = ((w1s.size + w2m.size) * 2
                   + (a1i.size + a1o.size + a2i.size + a2o.size
                      + g1.size + b1.size + g2.size + b2.size) * 4)
    vmem_est = bt * per_sample + 2 * bytes_const
    vmem_limit = int(min(64 * 2**20, max(32 * 2**20, int(1.5 * vmem_est))))

    kernel = functools.partial(_res_block_kernel, eps=eps)
    ce = pl.CostEstimate(
        flops=2 * Bp * L * (3 * Cp * RHp + RHp * Hp),
        transcendentals=Bp * (Cp + RHp),
        bytes_accessed=Bp * L * (Cp + Hp) * 4 + bytes_const,
    )
    const2 = lambda b: (0, 0)

    out_p = pl.pallas_call(
        kernel,
        out_shape=jax.ShapeDtypeStruct((Bp, L, Hp), jnp.float32),
        grid=(nb,),
        in_specs=[
            pl.BlockSpec((bt, L, Cp), lambda b: (b, 0, 0)),      # x
            pl.BlockSpec((1, Cp), const2),                       # gn1 gamma
            pl.BlockSpec((1, Cp), const2),                       # gn1 beta
            pl.BlockSpec((Cp, 128), const2),                     # group mat in 1
            pl.BlockSpec((128, Cp), const2),                     # group mat out 1
            pl.BlockSpec((3 * Cp, RHp), const2),                 # conv1 weights
            pl.BlockSpec((1, RHp), const2),                      # gn2 gamma
            pl.BlockSpec((1, RHp), const2),                      # gn2 beta
            pl.BlockSpec((RHp, 128), const2),                    # group mat in 2
            pl.BlockSpec((128, RHp), const2),                    # group mat out 2
            pl.BlockSpec((RHp, Hp), const2),                     # conv2 weights
        ],
        out_specs=pl.BlockSpec((bt, L, Hp), lambda b: (b, 0, 0)),
        compiler_params=pltpu.CompilerParams(
            dimension_semantics=("parallel",),
            vmem_limit_bytes=vmem_limit),
        cost_estimate=ce,
    )(x_p, g1, b1, a1i, a1o, w1s, g2, b2, a2i, a2o, w2m)

    out_nlc = out_p[:B, :, :C]                                   # drop pads
    return jnp.transpose(out_nlc, (0, 2, 1))                     # NLC -> NCL


# ----------------------------------------------------------------------------
# Pure-JAX f32 reference (mirrors the PyTorch module)
# ----------------------------------------------------------------------------
def _gn_ref(x_ncl, gamma, beta, groups=8, eps=1e-5):
    B, C, L = x_ncl.shape
    xg = x_ncl.reshape(B, groups, C // groups, L)
    mean = xg.mean(axis=(2, 3), keepdims=True)
    var = xg.var(axis=(2, 3), keepdims=True)
    y = ((xg - mean) / jnp.sqrt(var + eps)).reshape(B, C, L)
    return y * gamma[None, :, None] + beta[None, :, None]


def _conv1d_ref(x_ncl, w, pad):
    return jax.lax.conv_general_dilated(
        x_ncl, w, (1,), [(pad, pad)], dimension_numbers=("NCH", "OIH", "NCH"))


def _residual_block_ref(x_ncl, params):
    h = jax.nn.relu(_gn_ref(x_ncl, params["gn1_w"], params["gn1_b"]))
    h = _conv1d_ref(h, params["conv1_w"], 1)
    h = jax.nn.relu(_gn_ref(h, params["gn2_w"], params["gn2_b"]))
    h = _conv1d_ref(h, params["conv2_w"], 0)
    return x_ncl + h


# ----------------------------------------------------------------------------
# Deterministic parameters + demo
# ----------------------------------------------------------------------------
def make_params(key, in_channels, num_hiddens, num_residual_hiddens):
    C, H, RH = in_channels, num_hiddens, num_residual_hiddens
    keys = iter(jax.random.split(key, 16))
    n = lambda shape, s=0.1: s * jax.random.normal(next(keys), shape, jnp.float32)
    return {
        "gn1_w": 1.0 + n((C,)), "gn1_b": n((C,)),
        "conv1_w": n((RH, C, 3)),
        "gn2_w": 1.0 + n((RH,)), "gn2_b": n((RH,)),
        "conv2_w": n((H, RH, 1)),
    }


if __name__ == "__main__":
    B, L = 2, 16
    num_hiddens, num_res_hiddens = 32, 16      # in_channels == num_hiddens

    key = jax.random.PRNGKey(0)
    kx, kp = jax.random.split(key)
    x = jax.random.normal(kx, (B, num_hiddens, L), jnp.float32)
    params = make_params(kp, num_hiddens, num_hiddens, num_res_hiddens)

    fwd = jax.jit(improved_residual_block_forward)
    out = jax.block_until_ready(fwd(x, params))

    ref = jax.block_until_ready(_residual_block_ref(x, params))
    assert out.shape == (B, num_hiddens, L), out.shape
    # bf16 MXU inputs (f32 accumulation / f32 GroupNorm) vs pure-f32 reference.
    np.testing.assert_allclose(np.asarray(out), np.asarray(ref),
                               rtol=2e-2, atol=2e-2)
    print("KERNEL_OK")
</pallas_src>

<mosaic_0001>
module attributes {stable_mosaic.version = 11 : i64} {
  func.func @_res_block_kernel(%arg0: i32, %arg1: memref<2x16x128xf32, #tpu.memory_space<vmem>>, %arg2: memref<1x128xf32, #tpu.memory_space<vmem>>, %arg3: memref<1x128xf32, #tpu.memory_space<vmem>>, %arg4: memref<128x128xf32, #tpu.memory_space<vmem>>, %arg5: memref<128x128xf32, #tpu.memory_space<vmem>>, %arg6: memref<384x128xbf16, #tpu.memory_space<vmem>>, %arg7: memref<1x128xf32, #tpu.memory_space<vmem>>, %arg8: memref<1x128xf32, #tpu.memory_space<vmem>>, %arg9: memref<128x128xf32, #tpu.memory_space<vmem>>, %arg10: memref<128x128xf32, #tpu.memory_space<vmem>>, %arg11: memref<128x128xbf16, #tpu.memory_space<vmem>>, %arg12: memref<2x16x128xf32, #tpu.memory_space<vmem>>) attributes {dimension_semantics = [#tpu.dimension_semantics<parallel>], iteration_bounds = array<i64: 1>, scalar_prefetch = 0 : i64, scratch_operands = 0 : i64, tpu.core_type = #tpu.core_type<tc>, window_params = [{transform_indices = @transform_0, window_bounds = array<i64: 2, 16, 128>}, {pipeline_mode = #tpu.pipeline_mode<synchronous>, transform_indices = @transform_1, window_bounds = array<i64: 1, 128>}, {pipeline_mode = #tpu.pipeline_mode<synchronous>, transform_indices = @transform_2, window_bounds = array<i64: 1, 128>}, {pipeline_mode = #tpu.pipeline_mode<synchronous>, transform_indices = @transform_3, window_bounds = array<i64: 128, 128>}, {pipeline_mode = #tpu.pipeline_mode<synchronous>, transform_indices = @transform_4, window_bounds = array<i64: 128, 128>}, {pipeline_mode = #tpu.pipeline_mode<synchronous>, transform_indices = @transform_5, window_bounds = array<i64: 384, 128>}, {pipeline_mode = #tpu.pipeline_mode<synchronous>, transform_indices = @transform_6, window_bounds = array<i64: 1, 128>}, {pipeline_mode = #tpu.pipeline_mode<synchronous>, transform_indices = @transform_7, window_bounds = array<i64: 1, 128>}, {pipeline_mode = #tpu.pipeline_mode<synchronous>, transform_indices = @transform_8, window_bounds = array<i64: 128, 128>}, {pipeline_mode = #tpu.pipeline_mode<synchronous>, transform_indices = @transform_9, window_bounds = array<i64: 128, 128>}, {pipeline_mode = #tpu.pipeline_mode<synchronous>, transform_indices = @transform_10, window_bounds = array<i64: 128, 128>}, {transform_indices = @transform_11, window_bounds = array<i64: 2, 16, 128>}]} {
    %c0 = arith.constant 0 : index
    %c0_0 = arith.constant 0 : index
    %c0_1 = arith.constant 0 : index
    %0 = vector.load %arg1[%c0, %c0_0, %c0_1] : memref<2x16x128xf32, #tpu.memory_space<vmem>>, vector<2x16x128xf32>
    %cst = arith.constant dense<0.000000e+00> : vector<2x128xf32>
    %1 = vector.multi_reduction <add>, %0, %cst [1] : vector<2x16x128xf32> to vector<2x128xf32>
    %c0_2 = arith.constant 0 : index
    %c0_3 = arith.constant 0 : index
    %2 = vector.load %arg4[%c0_2, %c0_3] : memref<128x128xf32, #tpu.memory_space<vmem>>, vector<128x128xf32>
    %cst_4 = arith.constant dense<0.000000e+00> : vector<2x128xf32>
    %3 = tpu.matmul %1, %2, %cst_4 {dimension_numbers = #tpu.dot_dimension_numbers<[1], [0], [0], [1], [0, 0, 1, 1], [], []>} : vector<2x128xf32>, vector<128x128xf32>, vector<2x128xf32> -> vector<2x128xf32>
    %c0_5 = arith.constant 0 : index
    %c0_6 = arith.constant 0 : index
    %4 = vector.load %arg5[%c0_5, %c0_6] : memref<128x128xf32, #tpu.memory_space<vmem>>, vector<128x128xf32>
    %cst_7 = arith.constant dense<0.000000e+00> : vector<2x128xf32>
    %5 = tpu.matmul %3, %4, %cst_7 {dimension_numbers = #tpu.dot_dimension_numbers<[1], [0], [0], [1], [0, 0, 1, 1], [], []>} : vector<2x128xf32>, vector<128x128xf32>, vector<2x128xf32> -> vector<2x128xf32>
    %6 = vector.shape_cast %5 : vector<2x128xf32> to vector<2x1x128xf32>
    %7 = vector.broadcast %6 : vector<2x1x128xf32> to vector<2x16x128xf32>
    %8 = arith.subf %0, %7 : vector<2x16x128xf32>
    %9 = arith.mulf %8, %8 : vector<2x16x128xf32>
    %cst_8 = arith.constant dense<0.000000e+00> : vector<2x128xf32>
    %10 = vector.multi_reduction <add>, %9, %cst_8 [1] : vector<2x16x128xf32> to vector<2x128xf32>
    %c0_9 = arith.constant 0 : index
    %c0_10 = arith.constant 0 : index
    %11 = vector.load %arg4[%c0_9, %c0_10] : memref<128x128xf32, #tpu.memory_space<vmem>>, vector<128x128xf32>
    %cst_11 = arith.constant dense<0.000000e+00> : vector<2x128xf32>
    %12 = tpu.matmul %10, %11, %cst_11 {dimension_numbers = #tpu.dot_dimension_numbers<[1], [0], [0], [1], [0, 0, 1, 1], [], []>} : vector<2x128xf32>, vector<128x128xf32>, vector<2x128xf32> -> vector<2x128xf32>
    %c0_12 = arith.constant 0 : index
    %c0_13 = arith.constant 0 : index
    %13 = vector.load %arg5[%c0_12, %c0_13] : memref<128x128xf32, #tpu.memory_space<vmem>>, vector<128x128xf32>
    %cst_14 = arith.constant dense<0.000000e+00> : vector<2x128xf32>
    %14 = tpu.matmul %12, %13, %cst_14 {dimension_numbers = #tpu.dot_dimension_numbers<[1], [0], [0], [1], [0, 0, 1, 1], [], []>} : vector<2x128xf32>, vector<128x128xf32>, vector<2x128xf32> -> vector<2x128xf32>
    %cst_15 = arith.constant 9.99999974E-6 : f32
    %15 = vector.broadcast %cst_15 : f32 to vector<2x128xf32>
    %16 = arith.addf %14, %15 : vector<2x128xf32>
    %17 = math.rsqrt %16 : vector<2x128xf32>
    %c0_16 = arith.constant 0 : index
    %c0_17 = arith.constant 0 : index
    %18 = vector.load %arg2[%c0_16, %c0_17] : memref<1x128xf32, #tpu.memory_space<vmem>>, vector<1x128xf32>
    %19 = vector.broadcast %18 : vector<1x128xf32> to vector<2x128xf32>
    %20 = arith.mulf %17, %19 : vector<2x128xf32>
    %21 = vector.shape_cast %20 : vector<2x128xf32> to vector<2x1x128xf32>
    %22 = vector.broadcast %21 : vector<2x1x128xf32> to vector<2x16x128xf32>
    %23 = arith.mulf %8, %22 : vector<2x16x128xf32>
    %c0_18 = arith.constant 0 : index
    %c0_19 = arith.constant 0 : index
    %24 = vector.load %arg3[%c0_18, %c0_19] : memref<1x128xf32, #tpu.memory_space<vmem>>, vector<1x128xf32>
    %25 = vector.shape_cast %24 : vector<1x128xf32> to vector<1x1x128xf32>
    %26 = vector.broadcast %25 : vector<1x1x128xf32> to vector<2x16x128xf32>
    %27 = arith.addf %23, %26 : vector<2x16x128xf32>
    %cst_20 = arith.constant 0.000000e+00 : f32
    %28 = vector.broadcast %cst_20 : f32 to vector<2x16x128xf32>
    %29 = arith.maximumf %27, %28 : vector<2x16x128xf32>
    %30 = arith.truncf %29 : vector<2x16x128xf32> to vector<2x16x128xbf16>
    %cst_21 = arith.constant 0.000000e+00 : bf16
    %31 = vector.broadcast %cst_21 : bf16 to vector<2x1x128xbf16>
    %32 = tpu.concatenate %31, %30, %31 in 1 : vector<2x1x128xbf16>, vector<2x16x128xbf16>, vector<2x1x128xbf16> -> vector<2x18x128xbf16>
    %33 = vector.extract_strided_slice %32 {offsets = [0, 0, 0], sizes = [2, 16, 128], strides = [1, 1, 1]} : vector<2x18x128xbf16> to vector<2x16x128xbf16>
    %34 = vector.extract_strided_slice %32 {offsets = [0, 1, 0], sizes = [2, 16, 128], strides = [1, 1, 1]} : vector<2x18x128xbf16> to vector<2x16x128xbf16>
    %35 = vector.extract_strided_slice %32 {offsets = [0, 2, 0], sizes = [2, 16, 128], strides = [1, 1, 1]} : vector<2x18x128xbf16> to vector<2x16x128xbf16>
    %36 = tpu.concatenate %33, %34, %35 in 2 : vector<2x16x128xbf16>, vector<2x16x128xbf16>, vector<2x16x128xbf16> -> vector<2x16x384xbf16>
    %37 = vector.shape_cast %36 : vector<2x16x384xbf16> to vector<32x384xbf16>
    %c0_22 = arith.constant 0 : index
    %c0_23 = arith.constant 0 : index
    %38 = vector.load %arg6[%c0_22, %c0_23] : memref<384x128xbf16, #tpu.memory_space<vmem>>, vector<384x128xbf16>
    %cst_24 = arith.constant dense<0.000000e+00> : vector<32x128xf32>
    %39 = tpu.matmul %37, %38, %cst_24 {dimension_numbers = #tpu.dot_dimension_numbers<[1], [0], [0], [1], [0, 0, 1, 1], [], []>} : vector<32x384xbf16>, vector<384x128xbf16>, vector<32x128xf32> -> vector<32x128xf32>
    %40 = vector.shape_cast %39 : vector<32x128xf32> to vector<2x16x128xf32>
    %cst_25 = arith.constant dense<0.000000e+00> : vector<2x128xf32>
    %41 = vector.multi_reduction <add>, %40, %cst_25 [1] : vector<2x16x128xf32> to vector<2x128xf32>
    %c0_26 = arith.constant 0 : index
    %c0_27 = arith.constant 0 : index
    %42 = vector.load %arg9[%c0_26, %c0_27] : memref<128x128xf32, #tpu.memory_space<vmem>>, vector<128x128xf32>
    %cst_28 = arith.constant dense<0.000000e+00> : vector<2x128xf32>
    %43 = tpu.matmul %41, %42, %cst_28 {dimension_numbers = #tpu.dot_dimension_numbers<[1], [0], [0], [1], [0, 0, 1, 1], [], []>} : vector<2x128xf32>, vector<128x128xf32>, vector<2x128xf32> -> vector<2x128xf32>
    %c0_29 = arith.constant 0 : index
    %c0_30 = arith.constant 0 : index
    %44 = vector.load %arg10[%c0_29, %c0_30] : memref<128x128xf32, #tpu.memory_space<vmem>>, vector<128x128xf32>
    %cst_31 = arith.constant dense<0.000000e+00> : vector<2x128xf32>
    %45 = tpu.matmul %43, %44, %cst_31 {dimension_numbers = #tpu.dot_dimension_numbers<[1], [0], [0], [1], [0, 0, 1, 1], [], []>} : vector<2x128xf32>, vector<128x128xf32>, vector<2x128xf32> -> vector<2x128xf32>
    %46 = vector.shape_cast %45 : vector<2x128xf32> to vector<2x1x128xf32>
    %47 = vector.broadcast %46 : vector<2x1x128xf32> to vector<2x16x128xf32>
    %48 = arith.subf %40, %47 : vector<2x16x128xf32>
    %49 = arith.mulf %48, %48 : vector<2x16x128xf32>
    %cst_32 = arith.constant dense<0.000000e+00> : vector<2x128xf32>
    %50 = vector.multi_reduction <add>, %49, %cst_32 [1] : vector<2x16x128xf32> to vector<2x128xf32>
    %c0_33 = arith.constant 0 : index
    %c0_34 = arith.constant 0 : index
    %51 = vector.load %arg9[%c0_33, %c0_34] : memref<128x128xf32, #tpu.memory_space<vmem>>, vector<128x128xf32>
    %cst_35 = arith.constant dense<0.000000e+00> : vector<2x128xf32>
    %52 = tpu.matmul %50, %51, %cst_35 {dimension_numbers = #tpu.dot_dimension_numbers<[1], [0], [0], [1], [0, 0, 1, 1], [], []>} : vector<2x128xf32>, vector<128x128xf32>, vector<2x128xf32> -> vector<2x128xf32>
    %c0_36 = arith.constant 0 : index
    %c0_37 = arith.constant 0 : index
    %53 = vector.load %arg10[%c0_36, %c0_37] : memref<128x128xf32, #tpu.memory_space<vmem>>, vector<128x128xf32>
    %cst_38 = arith.constant dense<0.000000e+00> : vector<2x128xf32>
    %54 = tpu.matmul %52, %53, %cst_38 {dimension_numbers = #tpu.dot_dimension_numbers<[1], [0], [0], [1], [0, 0, 1, 1], [], []>} : vector<2x128xf32>, vector<128x128xf32>, vector<2x128xf32> -> vector<2x128xf32>
    %cst_39 = arith.constant 9.99999974E-6 : f32
    %55 = vector.broadcast %cst_39 : f32 to vector<2x128xf32>
    %56 = arith.addf %54, %55 : vector<2x128xf32>
    %57 = math.rsqrt %56 : vector<2x128xf32>
    %c0_40 = arith.constant 0 : index
    %c0_41 = arith.constant 0 : index
    %58 = vector.load %arg7[%c0_40, %c0_41] : memref<1x128xf32, #tpu.memory_space<vmem>>, vector<1x128xf32>
    %59 = vector.broadcast %58 : vector<1x128xf32> to vector<2x128xf32>
    %60 = arith.mulf %57, %59 : vector<2x128xf32>
    %61 = vector.shape_cast %60 : vector<2x128xf32> to vector<2x1x128xf32>
    %62 = vector.broadcast %61 : vector<2x1x128xf32> to vector<2x16x128xf32>
    %63 = arith.mulf %48, %62 : vector<2x16x128xf32>
    %c0_42 = arith.constant 0 : index
    %c0_43 = arith.constant 0 : index
    %64 = vector.load %arg8[%c0_42, %c0_43] : memref<1x128xf32, #tpu.memory_space<vmem>>, vector<1x128xf32>
    %65 = vector.shape_cast %64 : vector<1x128xf32> to vector<1x1x128xf32>
    %66 = vector.broadcast %65 : vector<1x1x128xf32> to vector<2x16x128xf32>
    %67 = arith.addf %63, %66 : vector<2x16x128xf32>
    %cst_44 = arith.constant 0.000000e+00 : f32
    %68 = vector.broadcast %cst_44 : f32 to vector<2x16x128xf32>
    %69 = arith.maximumf %67, %68 : vector<2x16x128xf32>
    %70 = arith.truncf %69 : vector<2x16x128xf32> to vector<2x16x128xbf16>
    %71 = vector.shape_cast %70 : vector<2x16x128xbf16> to vector<32x128xbf16>
    %c0_45 = arith.constant 0 : index
    %c0_46 = arith.constant 0 : index
    %72 = vector.load %arg11[%c0_45, %c0_46] : memref<128x128xbf16, #tpu.memory_space<vmem>>, vector<128x128xbf16>
    %cst_47 = arith.constant dense<0.000000e+00> : vector<32x128xf32>
    %73 = tpu.matmul %71, %72, %cst_47 {dimension_numbers = #tpu.dot_dimension_numbers<[1], [0], [0], [1], [0, 0, 1, 1], [], []>} : vector<32x128xbf16>, vector<128x128xbf16>, vector<32x128xf32> -> vector<32x128xf32>
    %74 = vector.shape_cast %73 : vector<32x128xf32> to vector<2x16x128xf32>
    %c0_48 = arith.constant 0 : index
    %c0_49 = arith.constant 0 : index
    %c0_50 = arith.constant 0 : index
    %75 = vector.load %arg1[%c0_48, %c0_49, %c0_50] : memref<2x16x128xf32, #tpu.memory_space<vmem>>, vector<2x16x128xf32>
    %76 = arith.addf %74, %75 : vector<2x16x128xf32>
    %c0_51 = arith.constant 0 : index
    %c0_52 = arith.constant 0 : index
    %c0_53 = arith.constant 0 : index
    %77 = vector.load %arg12[%c0_51, %c0_52, %c0_53] : memref<2x16x128xf32, #tpu.memory_space<vmem>>, vector<2x16x128xf32>
    tpu.vector_store %arg12[%c0_51, %c0_52, %c0_53], %76 {strides = array<i32>} : memref<2x16x128xf32, #tpu.memory_space<vmem>>, vector<2x16x128xf32>,
    return
  }
  func.func @transform_0(%arg0: i32) -> (i32, i32, i32) {
    %c0_i32 = arith.constant 0 : i32
    %c0_i32_0 = arith.constant 0 : i32
    %c0_i32_1 = arith.constant 0 : i32
    return %arg0, %c0_i32, %c0_i32_0 : i32, i32, i32
  }
  func.func @transform_1(%arg0: i32) -> (i32, i32) {
    %c0_i32 = arith.constant 0 : i32
    %c0_i32_0 = arith.constant 0 : i32
    %c0_i32_1 = arith.constant 0 : i32
    return %c0_i32, %c0_i32_0 : i32, i32
  }
  func.func @transform_2(%arg0: i32) -> (i32, i32) {
    %c0_i32 = arith.constant 0 : i32
    %c0_i32_0 = arith.constant 0 : i32
    %c0_i32_1 = arith.constant 0 : i32
    return %c0_i32, %c0_i32_0 : i32, i32
  }
  func.func @transform_3(%arg0: i32) -> (i32, i32) {
    %c0_i32 = arith.constant 0 : i32
    %c0_i32_0 = arith.constant 0 : i32
    %c0_i32_1 = arith.constant 0 : i32
    return %c0_i32, %c0_i32_0 : i32, i32
  }
  func.func @transform_4(%arg0: i32) -> (i32, i32) {
    %c0_i32 = arith.constant 0 : i32
    %c0_i32_0 = arith.constant 0 : i32
    %c0_i32_1 = arith.constant 0 : i32
    return %c0_i32, %c0_i32_0 : i32, i32
  }
  func.func @transform_5(%arg0: i32) -> (i32, i32) {
    %c0_i32 = arith.constant 0 : i32
    %c0_i32_0 = arith.constant 0 : i32
    %c0_i32_1 = arith.constant 0 : i32
    return %c0_i32, %c0_i32_0 : i32, i32
  }
  func.func @transform_6(%arg0: i32) -> (i32, i32) {
    %c0_i32 = arith.constant 0 : i32
    %c0_i32_0 = arith.constant 0 : i32
    %c0_i32_1 = arith.constant 0 : i32
    return %c0_i32, %c0_i32_0 : i32, i32
  }
  func.func @transform_7(%arg0: i32) -> (i32, i32) {
    %c0_i32 = arith.constant 0 : i32
    %c0_i32_0 = arith.constant 0 : i32
    %c0_i32_1 = arith.constant 0 : i32
    return %c0_i32, %c0_i32_0 : i32, i32
  }
  func.func @transform_8(%arg0: i32) -> (i32, i32) {
    %c0_i32 = arith.constant 0 : i32
    %c0_i32_0 = arith.constant 0 : i32
    %c0_i32_1 = arith.constant 0 : i32
    return %c0_i32, %c0_i32_0 : i32, i32
  }
  func.func @transform_9(%arg0: i32) -> (i32, i32) {
    %c0_i32 = arith.constant 0 : i32
    %c0_i32_0 = arith.constant 0 : i32
    %c0_i32_1 = arith.constant 0 : i32
    return %c0_i32, %c0_i32_0 : i32, i32
  }
  func.func @transform_10(%arg0: i32) -> (i32, i32) {
    %c0_i32 = arith.constant 0 : i32
    %c0_i32_0 = arith.constant 0 : i32
    %c0_i32_1 = arith.constant 0 : i32
    return %c0_i32, %c0_i32_0 : i32, i32
  }
  func.func @transform_11(%arg0: i32) -> (i32, i32, i32) {
    %c0_i32 = arith.constant 0 : i32
    %c0_i32_0 = arith.constant 0 : i32
    %c0_i32_1 = arith.constant 0 : i32
    return %arg0, %c0_i32, %c0_i32_0 : i32, i32, i32
  }
}

</mosaic_0001>

<llo_original>
// kernel: improved_residual_block_forward.1
$region0: #{improved_residual_block_forward.1}
  #allocation0 [shape = 'u32[]', space=smem, size = 0x4, offset = 0x4, fixed_abs, tag = 'smem constant byte address 0x4 - core index']
  #allocation1 [shape = 'u32[144,128]{1,0:T(1,128)}', space=vmem, size = 0x12000, scoped, tag = 'internal scratch']
  %s0 = inlined_call_operand.vmem [shape: f32[2,16,128], index: 0, kind: input, shape index: {}]
  %s1 = inlined_call_operand.vmem [shape: f32[1,128], index: 1, kind: input, shape index: {}]
  %s2 = inlined_call_operand.vmem [shape: f32[1,128], index: 2, kind: input, shape index: {}]
  %s3 = inlined_call_operand.vmem [shape: f32[128,128], index: 3, kind: input, shape index: {}]
  %s4 = inlined_call_operand.vmem [shape: f32[128,128], index: 4, kind: input, shape index: {}]
  %s5 = inlined_call_operand.vmem [shape: bf16[384,128], index: 5, kind: input, shape index: {}]
  %s6 = inlined_call_operand.vmem [shape: f32[1,128], index: 6, kind: input, shape index: {}]
  %s7 = inlined_call_operand.vmem [shape: f32[1,128], index: 7, kind: input, shape index: {}]
  %s8 = inlined_call_operand.vmem [shape: f32[128,128], index: 8, kind: input, shape index: {}]
  %s9 = inlined_call_operand.vmem [shape: f32[128,128], index: 9, kind: input, shape index: {}]
  %s10 = inlined_call_operand.vmem [shape: bf16[128,128], index: 10, kind: input, shape index: {}]
  %s11 = inlined_call_operand.vmem [shape: f32[2,16,128], index: 11, kind: output, shape index: {}]
  %s12 = sld [smem:[#allocation0]]
  $region54: #{improved_residual_block_forward.1} parent=0
    _
  %s14 = ssub.s32 1, %s12
  %s15 = scalar_select 0, %s14, %s12
  // Predicated region
  $region2: #{improved_residual_block_forward.1} parent=0 // pred_check
    _
  $region3: #{improved_residual_block_forward.1} parent=0 // pred_check_branch
    %17 = sbr.rel (0) target = $region5
  $region4: #{improved_residual_block_forward.1} parent=0 // pred_region
    _
  $region5: #{improved_residual_block_forward.1} parent=0 // pred_fallthru
    _
  // Predicated region
  $region6: #{improved_residual_block_forward.1} parent=0 // pred_check
    _
  $region7: #{improved_residual_block_forward.1} parent=0 // pred_check_branch
    %19 = sbr.rel (0) target = $region9
  $region8: #{improved_residual_block_forward.1} parent=0 // pred_region
    _
  $region9: #{improved_residual_block_forward.1} parent=0 // pred_fallthru
    _
  // Predicated region
  $region10: #{improved_residual_block_forward.1} parent=0 // pred_check
    _
  $region11: #{improved_residual_block_forward.1} parent=0 // pred_check_branch
    %21 = sbr.rel (0) target = $region13
  $region12: #{improved_residual_block_forward.1} parent=0 // pred_region
    _
  $region13: #{improved_residual_block_forward.1} parent=0 // pred_fallthru
    _
  // Predicated region
  $region14: #{improved_residual_block_forward.1} parent=0 // pred_check
    _
  $region15: #{improved_residual_block_forward.1} parent=0 // pred_check_branch
    %23 = sbr.rel (0) target = $region17
  $region16: #{improved_residual_block_forward.1} parent=0 // pred_region
    _
  $region17: #{improved_residual_block_forward.1} parent=0 // pred_fallthru
    _
  // Predicated region
  $region18: #{improved_residual_block_forward.1} parent=0 // pred_check
    _
  $region19: #{improved_residual_block_forward.1} parent=0 // pred_check_branch
    %25 = sbr.rel (0) target = $region21
  $region20: #{improved_residual_block_forward.1} parent=0 // pred_region
    _
  $region21: #{improved_residual_block_forward.1} parent=0 // pred_fallthru
    _
  // Predicated region
  $region22: #{improved_residual_block_forward.1} parent=0 // pred_check
    _
  $region23: #{improved_residual_block_forward.1} parent=0 // pred_check_branch
    %27 = sbr.rel (0) target = $region25
  $region24: #{improved_residual_block_forward.1} parent=0 // pred_region
    _
  $region25: #{improved_residual_block_forward.1} parent=0 // pred_fallthru
    _
  // Predicated region
  $region26: #{improved_residual_block_forward.1} parent=0 // pred_check
    _
  $region27: #{improved_residual_block_forward.1} parent=0 // pred_check_branch
    %29 = sbr.rel (0) target = $region29
  $region28: #{improved_residual_block_forward.1} parent=0 // pred_region
    _
  $region29: #{improved_residual_block_forward.1} parent=0 // pred_fallthru
    _
  // Predicated region
  $region30: #{improved_residual_block_forward.1} parent=0 // pred_check
    _
  $region31: #{improved_residual_block_forward.1} parent=0 // pred_check_branch
    %31 = sbr.rel (0) target = $region33
  $region32: #{improved_residual_block_forward.1} parent=0 // pred_region
    _
  $region33: #{improved_residual_block_forward.1} parent=0 // pred_fallthru
    _
  // Predicated region
  $region34: #{improved_residual_block_forward.1} parent=0 // pred_check
    _
  $region35: #{improved_residual_block_forward.1} parent=0 // pred_check_branch
    %33 = sbr.rel (0) target = $region37
  $region36: #{improved_residual_block_forward.1} parent=0 // pred_region
    _
  $region37: #{improved_residual_block_forward.1} parent=0 // pred_fallthru
    _
  // Predicated region
  $region38: #{improved_residual_block_forward.1} parent=0 // pred_check
    _
  $region39: #{improved_residual_block_forward.1} parent=0 // pred_check_branch
    %35 = sbr.rel (0) target = $region41
  $region40: #{improved_residual_block_forward.1} parent=0 // pred_region
    _
  $region41: #{improved_residual_block_forward.1} parent=0 // pred_fallthru
    _
  // Predicated region
  $region42: #{improved_residual_block_forward.1} parent=0 // pred_check
    _
  $region43: #{improved_residual_block_forward.1} parent=0 // pred_check_branch
    %37 = sbr.rel (0) target = $region45
  $region44: #{improved_residual_block_forward.1} parent=0 // pred_region
    _
  $region45: #{improved_residual_block_forward.1} parent=0 // pred_fallthru
    _
  %v39 = vld [vmem:[%s0] sm:$0xff]
  %v40 = vld [vmem:[%s0 + $0x8] sm:$0xff]
  %v41 = vld [vmem:[%s0 + $0x10] sm:$0xff]
  %v42 = vld [vmem:[%s0 + $0x18] sm:$0xff]
  %v43 = vadd.f32 %v39, %v40
  %v44 = vrot.slane %v43, 4
  %v45 = vadd.f32 %v43, %v44
  %v46 = vrot.slane %v45, 2
  %v47 = vadd.f32 %v45, %v46
  %v48 = vrot.slane %v47, 1
  %v49 = vadd.f32 %v47, %v48
  %v50 = vadd.f32 %v41, %v42
  %v51 = vrot.slane %v50, 4
  %v52 = vadd.f32 %v50, %v51
  %v53 = vrot.slane %v52, 2
  %v54 = vadd.f32 %v52, %v53
  %v55 = vrot.slane %v54, 1
  %v56 = vadd.f32 %v54, %v55
  %v57 = vld [vmem:[%s3] sm:$0xff]
  %v58 = vld [vmem:[%s3 + $0x8] sm:$0xff]
  %v59 = vld [vmem:[%s3 + $0x10] sm:$0xff]
  %v60 = vld [vmem:[%s3 + $0x18] sm:$0xff]
  %v61 = vld [vmem:[%s3 + $0x20] sm:$0xff]
  %v62 = vld [vmem:[%s3 + $0x28] sm:$0xff]
  %v63 = vld [vmem:[%s3 + $0x30] sm:$0xff]
  %v64 = vld [vmem:[%s3 + $0x38] sm:$0xff]
  %v65 = vld [vmem:[%s3 + $0x40] sm:$0xff]
  %v66 = vld [vmem:[%s3 + $0x48] sm:$0xff]
  %v67 = vld [vmem:[%s3 + $0x50] sm:$0xff]
  %v68 = vld [vmem:[%s3 + $0x58] sm:$0xff]
  %v69 = vld [vmem:[%s3 + $0x60] sm:$0xff]
  %v70 = vld [vmem:[%s3 + $0x68] sm:$0xff]
  %v71 = vld [vmem:[%s3 + $0x70] sm:$0xff]
  %v72 = vld [vmem:[%s3 + $0x78] sm:$0xff]
  %vm75 = vcmask 1041409
  %v76 = vsel %vm75, %v56, %v49
  %78 = vmatprep.subr.mxu0 0.0
  %79 = vmatpush1.msra.mxu0 %v72
  %80 = vmatprep.subr.mxu0 0.0
  %81 = vmatpush1.msra.mxu0 %v71
  %82 = vmatprep.subr.mxu0 0.0
  %83 = vmatpush1.msra.mxu0 %v70
  %84 = vmatprep.subr.mxu0 0.0
  %85 = vmatpush1.msra.mxu0 %v69
  %86 = vmatprep.subr.mxu0 0.0
  %87 = vmatpush1.msra.mxu0 %v68
  %88 = vmatprep.subr.mxu0 0.0
  %89 = vmatpush1.msra.mxu0 %v67
  %90 = vmatprep.subr.mxu0 0.0
  %91 = vmatpush1.msra.mxu0 %v66
  %92 = vmatprep.subr.mxu0 0.0
  %93 = vmatpush1.msra.mxu0 %v65
  %94 = vmatprep.subr.mxu0 0.0
  %95 = vmatpush1.msra.mxu0 %v64
  %96 = vmatprep.subr.mxu0 0.0
  %97 = vmatpush1.msra.mxu0 %v63
  %98 = vmatprep.subr.mxu0 0.0
  %99 = vmatpush1.msra.mxu0 %v62
  %100 = vmatprep.subr.mxu0 0.0
  %101 = vmatpush1.msra.mxu0 %v61
  %102 = vmatprep.subr.mxu0 0.0
  %103 = vmatpush1.msra.mxu0 %v60
  %104 = vmatprep.subr.mxu0 0.0
  %105 = vmatpush1.msra.mxu0 %v59
  %106 = vmatprep.subr.mxu0 0.0
  %107 = vmatpush1.msra.mxu0 %v58
  %108 = vmatprep.subr.mxu0 0.0
  %109 = vmatpush1.msra.mxu0 %v57
  %110 = vmatprep.subr.mxu0 0.0
  %111 = vmatpush2.msra.mxu0 0.0
  %112 = vmatprep.subr.mxu0 0.0
  %113 = vmatpush2.msra.mxu0 0.0
  %114 = vmatprep.subr.mxu0 0.0
  %115 = vmatpush2.msra.mxu0 0.0
  %116 = vmatprep.subr.mxu0 0.0
  %117 = vmatpush2.msra.mxu0 0.0
  %118 = vmatprep.subr.mxu0 0.0
  %119 = vmatpush2.msra.mxu0 0.0
  %120 = vmatprep.subr.mxu0 0.0
  %121 = vmatpush2.msra.mxu0 0.0
  %122 = vmatprep.subr.mxu0 0.0
  %123 = vmatpush2.msra.mxu0 0.0
  %124 = vmatprep.subr.mxu0 0.0
  %125 = vmatpush2.msra.mxu0 0.0
  %126 = vmatprep.subr.mxu0 0.0
  %127 = vmatpush2.msra.mxu0 0.0
  %128 = vmatprep.subr.mxu0 0.0
  %129 = vmatpush2.msra.mxu0 0.0
  %130 = vmatprep.subr.mxu0 0.0
  %131 = vmatpush2.msra.mxu0 0.0
  %132 = vmatprep.subr.mxu0 0.0
  %133 = vmatpush2.msra.mxu0 0.0
  %134 = vmatprep.subr.mxu0 0.0
  %135 = vmatpush2.msra.mxu0 0.0
  %136 = vmatprep.subr.mxu0 0.0
  %137 = vmatpush2.msra.mxu0 0.0
  %138 = vmatprep.subr.mxu0 0.0
  %139 = vmatpush2.msra.mxu0 0.0
  %140 = vmatprep.subr.mxu0 0.0
  %141 = vmatpush2.msra.mxu0 0.0
  %142 = vmatprep.mubr.f32.mxu0 0.0
  %143 = vmatmul.mubr.f32.gmra.mxu0 %v76
  %v144 = vpop.f32.mrf.mxu0
  %v145 = vadd.f32 0.0, %v144
  %v146 = vpop.f32.mrf.mxu0
  %147 = vdwg.mxu0
  %v148 = vld [vmem:[%s4] sm:$0xff]
  %v149 = vld [vmem:[%s4 + $0x8] sm:$0xff]
  %v150 = vld [vmem:[%s4 + $0x10] sm:$0xff]
  %v151 = vld [vmem:[%s4 + $0x18] sm:$0xff]
  %v152 = vld [vmem:[%s4 + $0x20] sm:$0xff]
  %v153 = vld [vmem:[%s4 + $0x28] sm:$0xff]
  %v154 = vld [vmem:[%s4 + $0x30] sm:$0xff]
  %v155 = vld [vmem:[%s4 + $0x38] sm:$0xff]
  %v156 = vld [vmem:[%s4 + $0x40] sm:$0xff]
  %v157 = vld [vmem:[%s4 + $0x48] sm:$0xff]
  %v158 = vld [vmem:[%s4 + $0x50] sm:$0xff]
  %v159 = vld [vmem:[%s4 + $0x58] sm:$0xff]
  %v160 = vld [vmem:[%s4 + $0x60] sm:$0xff]
  %v161 = vld [vmem:[%s4 + $0x68] sm:$0xff]
  %v162 = vld [vmem:[%s4 + $0x70] sm:$0xff]
  %v163 = vld [vmem:[%s4 + $0x78] sm:$0xff]
  %164 = vmatprep.subr.mxu0 0.0
  %165 = vmatpush1.msra.mxu0 %v163
  %166 = vmatprep.subr.mxu0 0.0
  %167 = vmatpush1.msra.mxu0 %v162
  %168 = vmatprep.subr.mxu0 0.0
  %169 = vmatpush1.msra.mxu0 %v161
  %170 = vmatprep.subr.mxu0 0.0
  %171 = vmatpush1.msra.mxu0 %v160
  %172 = vmatprep.subr.mxu0 0.0
  %173 = vmatpush1.msra.mxu0 %v159
  %174 = vmatprep.subr.mxu0 0.0
  %175 = vmatpush1.msra.mxu0 %v158
  %176 = vmatprep.subr.mxu0 0.0
  %177 = vmatpush1.msra.mxu0 %v157
  %178 = vmatprep.subr.mxu0 0.0
  %179 = vmatpush1.msra.mxu0 %v156
  %180 = vmatprep.subr.mxu0 0.0
  %181 = vmatpush1.msra.mxu0 %v155
  %182 = vmatprep.subr.mxu0 0.0
  %183 = vmatpush1.msra.mxu0 %v154
  %184 = vmatprep.subr.mxu0 0.0
  %185 = vmatpush1.msra.mxu0 %v153
  %186 = vmatprep.subr.mxu0 0.0
  %187 = vmatpush1.msra.mxu0 %v152
  %188 = vmatprep.subr.mxu0 0.0
  %189 = vmatpush1.msra.mxu0 %v151
  %190 = vmatprep.subr.mxu0 0.0
  %191 = vmatpush1.msra.mxu0 %v150
  %192 = vmatprep.subr.mxu0 0.0
  %193 = vmatpush1.msra.mxu0 %v149
  %194 = vmatprep.subr.mxu0 0.0
  %195 = vmatpush1.msra.mxu0 %v148
  %196 = vmatprep.subr.mxu0 0.0
  %197 = vmatpush2.msra.mxu0 0.0
  %198 = vmatprep.subr.mxu0 0.0
  %199 = vmatpush2.msra.mxu0 0.0
  %200 = vmatprep.subr.mxu0 0.0
  %201 = vmatpush2.msra.mxu0 0.0
  %202 = vmatprep.subr.mxu0 0.0
  %203 = vmatpush2.msra.mxu0 0.0
  %204 = vmatprep.subr.mxu0 0.0
  %205 = vmatpush2.msra.mxu0 0.0
  %206 = vmatprep.subr.mxu0 0.0
  %207 = vmatpush2.msra.mxu0 0.0
  %208 = vmatprep.subr.mxu0 0.0
  %209 = vmatpush2.msra.mxu0 0.0
  %210 = vmatprep.subr.mxu0 0.0
  %211 = vmatpush2.msra.mxu0 0.0
  %212 = vmatprep.subr.mxu0 0.0
  %213 = vmatpush2.msra.mxu0 0.0
  %214 = vmatprep.subr.mxu0 0.0
  %215 = vmatpush2.msra.mxu0 0.0
  %216 = vmatprep.subr.mxu0 0.0
  %217 = vmatpush2.msra.mxu0 0.0
  %218 = vmatprep.subr.mxu0 0.0
  %219 = vmatpush2.msra.mxu0 0.0
  %220 = vmatprep.subr.mxu0 0.0
  %221 = vmatpush2.msra.mxu0 0.0
  %222 = vmatprep.subr.mxu0 0.0
  %223 = vmatpush2.msra.mxu0 0.0
  %224 = vmatprep.subr.mxu0 0.0
  %225 = vmatpush2.msra.mxu0 0.0
  %226 = vmatprep.subr.mxu0 0.0
  %227 = vmatpush2.msra.mxu0 0.0
  %228 = vmatprep.mubr.f32.mxu0 0.0
  %229 = vmatmul.mubr.f32.gmra.mxu0 %v145
  %v230 = vpop.f32.mrf.mxu0
  %v231 = vadd.f32 0.0, %v230
  %v232 = vpop.f32.mrf.mxu0
  %233 = vdwg.mxu0
  %v236 = vunpack.c.l.s4 1966171168
  %v237 = vunpack.c.0.s8 %v236
  %v238 = vlaneseq
  %v239 = vshrl.u32 %v238, 7
  %v240 = vsub.s32 %v237, %v239
  %v241 = vrot.slane %v231, %v240
  %v242 = vcombine.high %v241, %v241
  %v244 = vunpack.c.l.s4 1966171168
  %v245 = vunpack.c.0.s8 %v244
  %v246 = vlaneseq
  %v247 = vshrl.u32 %v246, 7
  %v248 = vsub.s32 %v245, %v247
  %v249 = vrot.slane %v241, %v248
  %v251 = vunpack.c.l.s4 1966171168
  %v252 = vunpack.c.0.s8 %v251
  %v253 = vlaneseq
  %v254 = vshrl.u32 %v253, 7
  %v255 = vsub.s32 %v252, %v254
  %v256 = vrot.slane %v242, %v255
  %v257 = vlaneseq
  %v258 = vshrl.u32 %v257, 7
  %v259 = vsub.s32 0, %v258
  %v260 = vrot.slane %v249, %v259
  %v261 = vlaneseq
  %v262 = vshrl.u32 %v261, 7
  %v263 = vsub.s32 0, %v262
  %v264 = vrot.slane %v256, %v263
  %v267 = vsub.f32 %v39, %v260
  %v268 = vsub.f32 %v40, %v260
  %v269 = vsub.f32 %v41, %v264
  %v270 = vsub.f32 %v42, %v264
  %v271 = vmul.f32 %v267, %v267
  %v272 = vmul.f32 %v268, %v268
  %v273 = vmul.f32 %v269, %v269
  %v274 = vmul.f32 %v270, %v270
  %v275 = vadd.f32 %v271, %v272
  %v276 = vrot.slane %v275, 4
  %v277 = vadd.f32 %v275, %v276
  %v278 = vrot.slane %v277, 2
  %v279 = vadd.f32 %v277, %v278
  %v280 = vrot.slane %v279, 1
  %v281 = vadd.f32 %v279, %v280
  %v282 = vadd.f32 %v273, %v274
  %v283 = vrot.slane %v282, 4
  %v284 = vadd.f32 %v282, %v283
  %v285 = vrot.slane %v284, 2
  %v286 = vadd.f32 %v284, %v285
  %v287 = vrot.slane %v286, 1
  %v288 = vadd.f32 %v286, %v287
  %v291 = vsel %vm75, %v288, %v281
  %293 = vmatprep.subr.mxu0 0.0
  %294 = vmatpush1.msra.mxu0 %v72
  %295 = vmatprep.subr.mxu0 0.0
  %296 = vmatpush1.msra.mxu0 %v71
  %297 = vmatprep.subr.mxu0 0.0
  %298 = vmatpush1.msra.mxu0 %v70
  %299 = vmatprep.subr.mxu0 0.0
  %300 = vmatpush1.msra.mxu0 %v69
  %301 = vmatprep.subr.mxu0 0.0
  %302 = vmatpush1.msra.mxu0 %v68
  %303 = vmatprep.subr.mxu0 0.0
  %304 = vmatpush1.msra.mxu0 %v67
  %305 = vmatprep.subr.mxu0 0.0
  %306 = vmatpush1.msra.mxu0 %v66
  %307 = vmatprep.subr.mxu0 0.0
  %308 = vmatpush1.msra.mxu0 %v65
  %309 = vmatprep.subr.mxu0 0.0
  %310 = vmatpush1.msra.mxu0 %v64
  %311 = vmatprep.subr.mxu0 0.0
  %312 = vmatpush1.msra.mxu0 %v63
  %313 = vmatprep.subr.mxu0 0.0
  %314 = vmatpush1.msra.mxu0 %v62
  %315 = vmatprep.subr.mxu0 0.0
  %316 = vmatpush1.msra.mxu0 %v61
  %317 = vmatprep.subr.mxu0 0.0
  %318 = vmatpush1.msra.mxu0 %v60
  %319 = vmatprep.subr.mxu0 0.0
  %320 = vmatpush1.msra.mxu0 %v59
  %321 = vmatprep.subr.mxu0 0.0
  %322 = vmatpush1.msra.mxu0 %v58
  %323 = vmatprep.subr.mxu0 0.0
  %324 = vmatpush1.msra.mxu0 %v57
  %325 = vmatprep.subr.mxu0 0.0
  %326 = vmatpush2.msra.mxu0 0.0
  %327 = vmatprep.subr.mxu0 0.0
  %328 = vmatpush2.msra.mxu0 0.0
  %329 = vmatprep.subr.mxu0 0.0
  %330 = vmatpush2.msra.mxu0 0.0
  %331 = vmatprep.subr.mxu0 0.0
  %332 = vmatpush2.msra.mxu0 0.0
  %333 = vmatprep.subr.mxu0 0.0
  %334 = vmatpush2.msra.mxu0 0.0
  %335 = vmatprep.subr.mxu0 0.0
  %336 = vmatpush2.msra.mxu0 0.0
  %337 = vmatprep.subr.mxu0 0.0
  %338 = vmatpush2.msra.mxu0 0.0
  %339 = vmatprep.subr.mxu0 0.0
  %340 = vmatpush2.msra.mxu0 0.0
  %341 = vmatprep.subr.mxu0 0.0
  %342 = vmatpush2.msra.mxu0 0.0
  %343 = vmatprep.subr.mxu0 0.0
  %344 = vmatpush2.msra.mxu0 0.0
  %345 = vmatprep.subr.mxu0 0.0
  %346 = vmatpush2.msra.mxu0 0.0
  %347 = vmatprep.subr.mxu0 0.0
  %348 = vmatpush2.msra.mxu0 0.0
  %349 = vmatprep.subr.mxu0 0.0
  %350 = vmatpush2.msra.mxu0 0.0
  %351 = vmatprep.subr.mxu0 0.0
  %352 = vmatpush2.msra.mxu0 0.0
  %353 = vmatprep.subr.mxu0 0.0
  %354 = vmatpush2.msra.mxu0 0.0
  %355 = vmatprep.subr.mxu0 0.0
  %356 = vmatpush2.msra.mxu0 0.0
  %357 = vmatprep.mubr.f32.mxu0 0.0
  %358 = vmatmul.mubr.f32.gmra.mxu0 %v291
  %v359 = vpop.f32.mrf.mxu0
  %v360 = vadd.f32 0.0, %v359
  %v361 = vpop.f32.mrf.mxu0
  %362 = vdwg.mxu0
  %363 = vmatprep.subr.mxu0 0.0
  %364 = vmatpush1.msra.mxu0 %v163
  %365 = vmatprep.subr.mxu0 0.0
  %366 = vmatpush1.msra.mxu0 %v162
  %367 = vmatprep.subr.mxu0 0.0
  %368 = vmatpush1.msra.mxu0 %v161
  %369 = vmatprep.subr.mxu0 0.0
  %370 = vmatpush1.msra.mxu0 %v160
  %371 = vmatprep.subr.mxu0 0.0
  %372 = vmatpush1.msra.mxu0 %v159
  %373 = vmatprep.subr.mxu0 0.0
  %374 = vmatpush1.msra.mxu0 %v158
  %375 = vmatprep.subr.mxu0 0.0
  %376 = vmatpush1.msra.mxu0 %v157
  %377 = vmatprep.subr.mxu0 0.0
  %378 = vmatpush1.msra.mxu0 %v156
  %379 = vmatprep.subr.mxu0 0.0
  %380 = vmatpush1.msra.mxu0 %v155
  %381 = vmatprep.subr.mxu0 0.0
  %382 = vmatpush1.msra.mxu0 %v154
  %383 = vmatprep.subr.mxu0 0.0
  %384 = vmatpush1.msra.mxu0 %v153
  %385 = vmatprep.subr.mxu0 0.0
  %386 = vmatpush1.msra.mxu0 %v152
  %387 = vmatprep.subr.mxu0 0.0
  %388 = vmatpush1.msra.mxu0 %v151
  %389 = vmatprep.subr.mxu0 0.0
  %390 = vmatpush1.msra.mxu0 %v150
  %391 = vmatprep.subr.mxu0 0.0
  %392 = vmatpush1.msra.mxu0 %v149
  %393 = vmatprep.subr.mxu0 0.0
  %394 = vmatpush1.msra.mxu0 %v148
  %395 = vmatprep.subr.mxu0 0.0
  %396 = vmatpush2.msra.mxu0 0.0
  %397 = vmatprep.subr.mxu0 0.0
  %398 = vmatpush2.msra.mxu0 0.0
  %399 = vmatprep.subr.mxu0 0.0
  %400 = vmatpush2.msra.mxu0 0.0
  %401 = vmatprep.subr.mxu0 0.0
  %402 = vmatpush2.msra.mxu0 0.0
  %403 = vmatprep.subr.mxu0 0.0
  %404 = vmatpush2.msra.mxu0 0.0
  %405 = vmatprep.subr.mxu0 0.0
  %406 = vmatpush2.msra.mxu0 0.0
  %407 = vmatprep.subr.mxu0 0.0
  %408 = vmatpush2.msra.mxu0 0.0
  %409 = vmatprep.subr.mxu0 0.0
  %410 = vmatpush2.msra.mxu0 0.0
  %411 = vmatprep.subr.mxu0 0.0
  %412 = vmatpush2.msra.mxu0 0.0
  %413 = vmatprep.subr.mxu0 0.0
  %414 = vmatpush2.msra.mxu0 0.0
  %415 = vmatprep.subr.mxu0 0.0
  %416 = vmatpush2.msra.mxu0 0.0
  %417 = vmatprep.subr.mxu0 0.0
  %418 = vmatpush2.msra.mxu0 0.0
  %419 = vmatprep.subr.mxu0 0.0
  %420 = vmatpush2.msra.mxu0 0.0
  %421 = vmatprep.subr.mxu0 0.0
  %422 = vmatpush2.msra.mxu0 0.0
  %423 = vmatprep.subr.mxu0 0.0
  %424 = vmatpush2.msra.mxu0 0.0
  %425 = vmatprep.subr.mxu0 0.0
  %426 = vmatpush2.msra.mxu0 0.0
  %427 = vmatprep.mubr.f32.mxu0 0.0
  %428 = vmatmul.mubr.f32.gmra.mxu0 %v360
  %v429 = vpop.f32.mrf.mxu0
  %v430 = vadd.f32 1e-05, %v429
  %v431 = vpop.f32.mrf.mxu0
  %432 = vdwg.mxu0
  %v433 = vrsqrt.pop %v430
  %v434 = vld [vmem:[%s1] sm:$0x1]
  %v436 = vlaneseq
  %v437 = vshrl.u32 %v436, 7
  %v438 = vsub.s32 0, %v437
  %v439 = vrot.slane %v434, %v438
  %v441 = vmul.f32 %v433, %v439
  %v444 = vunpack.c.l.s4 1966171168
  %v445 = vunpack.c.0.s8 %v444
  %v446 = vlaneseq
  %v447 = vshrl.u32 %v446, 7
  %v448 = vsub.s32 %v445, %v447
  %v449 = vrot.slane %v441, %v448
  %v450 = vcombine.high %v449, %v449
  %v452 = vunpack.c.l.s4 1966171168
  %v453 = vunpack.c.0.s8 %v452
  %v454 = vlaneseq
  %v455 = vshrl.u32 %v454, 7
  %v456 = vsub.s32 %v453, %v455
  %v457 = vrot.slane %v449, %v456
  %v459 = vunpack.c.l.s4 1966171168
  %v460 = vunpack.c.0.s8 %v459
  %v461 = vlaneseq
  %v462 = vshrl.u32 %v461, 7
  %v463 = vsub.s32 %v460, %v462
  %v464 = vrot.slane %v450, %v463
  %v465 = vlaneseq
  %v466 = vshrl.u32 %v465, 7
  %v467 = vsub.s32 0, %v466
  %v468 = vrot.slane %v457, %v467
  %v469 = vlaneseq
  %v470 = vshrl.u32 %v469, 7
  %v471 = vsub.s32 0, %v470
  %v472 = vrot.slane %v464, %v471
  %v475 = vmul.f32 %v267, %v468
  %v476 = vmul.f32 %v268, %v468
  %v477 = vmul.f32 %v269, %v472
  %v478 = vmul.f32 %v270, %v472
  %v479 = vld [vmem:[%s2] sm:$0x1]
  %v481 = vlaneseq
  %v482 = vshrl.u32 %v481, 7
  %v483 = vsub.s32 0, %v482
  %v484 = vrot.slane %v479, %v483
  %v486 = vadd.f32 %v475, %v484
  %v487 = vadd.f32 %v476, %v484
  %v488 = vadd.f32 %v477, %v484
  %v489 = vadd.f32 %v478, %v484
  %v490 = vmax.f32 %v486, 0.0
  %v491 = vmax.f32 %v487, 0.0
  %v492 = vmax.f32 %v488, 0.0
  %v493 = vmax.f32 %v489, 0.0
  %v494 = vpack.c.bf16 %v491, %v490
  %v495 = vpack.c.bf16 %v493, %v492
  %v497 = vshrl.u32 %v494, 16
  %v499 = vrot.slane %v497, 7
  %v500 = vshll.u32 %v494, 16
  %v502 = vor.u32 %v499, %v500
  %v504 = vshrl.u32 %v495, 16
  %v506 = vrot.slane %v504, 7
  %v507 = vshll.u32 %v495, 16
  %v509 = vor.u32 %v506, %v507
  %vm514 = vcmask 1040384
  %vm515 = vsmask.f32 256
  %vm516 = vmand %vm514, %vm515
  %v517 = vsel %vm516, 0, %v502
  %v518 = vsel %vm516, 0, %v509
  %v519 = vsel %vm516, %v499, 0
  %v520 = vsel %vm516, %v506, 0
  %vm521 = vsmask.f32 7424
  %v523 = vshrl.u32 %v517, 16
  %v525 = vshll.u32 %v517, 16
  %v527 = vrot.slane %v525, 1
  %v528 = vor.u32 %v523, %v527
  %v530 = vshll.u32 %v519, 16
  %v532 = vrot.slane %v530, 1
  %v533 = vsel %vm521, %v528, %v532
  %v535 = vshrl.u32 %v518, 16
  %v537 = vshll.u32 %v518, 16
  %v539 = vrot.slane %v537, 1
  %v540 = vor.u32 %v535, %v539
  %v542 = vshll.u32 %v520, 16
  %v544 = vrot.slane %v542, 1
  %v545 = vsel %vm521, %v540, %v544
  %vm552 = vcmask 1046528
  %v553 = vrot.slane %v517, 1
  %v554 = vrot.slane %v519, 1
  %v555 = vsel %vm552, %v553, %v554
  %v556 = vrot.slane %v518, 1
  %v557 = vrot.slane %v520, 1
  %v558 = vsel %vm552, %v556, %v557
  %v561 = vld [vmem:[%s5] sm:$0xf]
  %v562 = vld [vmem:[%s5 + $0x4] sm:$0xf]
  %v563 = vld [vmem:[%s5 + $0x8] sm:$0xf]
  %v564 = vld [vmem:[%s5 + $0xc] sm:$0xf]
  %v565 = vld [vmem:[%s5 + $0x10] sm:$0xf]
  %v566 = vld [vmem:[%s5 + $0x14] sm:$0xf]
  %v567 = vld [vmem:[%s5 + $0x18] sm:$0xf]
  %v568 = vld [vmem:[%s5 + $0x1c] sm:$0xf]
  %v569 = vld [vmem:[%s5 + $0x20] sm:$0xf]
  %v570 = vld [vmem:[%s5 + $0x24] sm:$0xf]
  %v571 = vld [vmem:[%s5 + $0x28] sm:$0xf]
  %v572 = vld [vmem:[%s5 + $0x2c] sm:$0xf]
  %v573 = vld [vmem:[%s5 + $0x30] sm:$0xf]
  %v574 = vld [vmem:[%s5 + $0x34] sm:$0xf]
  %v575 = vld [vmem:[%s5 + $0x38] sm:$0xf]
  %v576 = vld [vmem:[%s5 + $0x3c] sm:$0xf]
  %v577 = vld [vmem:[%s5 + $0x40] sm:$0xf]
  %v578 = vld [vmem:[%s5 + $0x44] sm:$0xf]
  %v579 = vld [vmem:[%s5 + $0x48] sm:$0xf]
  %v580 = vld [vmem:[%s5 + $0x4c] sm:$0xf]
  %v581 = vld [vmem:[%s5 + $0x50] sm:$0xf]
  %v582 = vld [vmem:[%s5 + $0x54] sm:$0xf]
  %v583 = vld [vmem:[%s5 + $0x58] sm:$0xf]
  %v584 = vld [vmem:[%s5 + $0x5c] sm:$0xf]
  %v585 = vld [vmem:[%s5 + $0x60] sm:$0xf]
  %v586 = vld [vmem:[%s5 + $0x64] sm:$0xf]
  %v587 = vld [vmem:[%s5 + $0x68] sm:$0xf]
  %v588 = vld [vmem:[%s5 + $0x6c] sm:$0xf]
  %v589 = vld [vmem:[%s5 + $0x70] sm:$0xf]
  %v590 = vld [vmem:[%s5 + $0x74] sm:$0xf]
  %v591 = vld [vmem:[%s5 + $0x78] sm:$0xf]
  %v592 = vld [vmem:[%s5 + $0x7c] sm:$0xf]
  %v593 = vld [vmem:[%s5 + $0x80] sm:$0xf]
  %v594 = vld [vmem:[%s5 + $0x84] sm:$0xf]
  %v595 = vld [vmem:[%s5 + $0x88] sm:$0xf]
  %v596 = vld [vmem:[%s5 + $0x8c] sm:$0xf]
  %v597 = vld [vmem:[%s5 + $0x90] sm:$0xf]
  %v598 = vld [vmem:[%s5 + $0x94] sm:$0xf]
  %v599 = vld [vmem:[%s5 + $0x98] sm:$0xf]
  %v600 = vld [vmem:[%s5 + $0x9c] sm:$0xf]
  %v601 = vld [vmem:[%s5 + $0xa0] sm:$0xf]
  %v602 = vld [vmem:[%s5 + $0xa4] sm:$0xf]
  %v603 = vld [vmem:[%s5 + $0xa8] sm:$0xf]
  %v604 = vld [vmem:[%s5 + $0xac] sm:$0xf]
  %v605 = vld [vmem:[%s5 + $0xb0] sm:$0xf]
  %v606 = vld [vmem:[%s5 + $0xb4] sm:$0xf]
  %v607 = vld [vmem:[%s5 + $0xb8] sm:$0xf]
  %v608 = vld [vmem:[%s5 + $0xbc] sm:$0xf]
  %v657 = vunpack.c.l.b16 %v561
  %v658 = vunpack.c.l.b16 %v562
  %v659 = vunpack.c.l.b16 %v563
  %v660 = vunpack.c.l.b16 %v564
  %v661 = vunpack.c.l.b16 %v565
  %v662 = vunpack.c.l.b16 %v566
  %v663 = vunpack.c.l.b16 %v567
  %v664 = vunpack.c.l.b16 %v568
  %v665 = vunpack.c.l.b16 %v569
  %v666 = vunpack.c.l.b16 %v570
  %v667 = vunpack.c.l.b16 %v571
  %v668 = vunpack.c.l.b16 %v572
  %v669 = vunpack.c.l.b16 %v573
  %v670 = vunpack.c.l.b16 %v574
  %v671 = vunpack.c.l.b16 %v575
  %v672 = vunpack.c.l.b16 %v576
  %v673 = vunpack.c.l.b16 %v577
  %v674 = vunpack.c.l.b16 %v578
  %v675 = vunpack.c.l.b16 %v579
  %v676 = vunpack.c.l.b16 %v580
  %v677 = vunpack.c.l.b16 %v581
  %v678 = vunpack.c.l.b16 %v582
  %v679 = vunpack.c.l.b16 %v583
  %v680 = vunpack.c.l.b16 %v584
  %v681 = vunpack.c.l.b16 %v585
  %v682 = vunpack.c.l.b16 %v586
  %v683 = vunpack.c.l.b16 %v587
  %v684 = vunpack.c.l.b16 %v588
  %v685 = vunpack.c.l.b16 %v589
  %v686 = vunpack.c.l.b16 %v590
  %v687 = vunpack.c.l.b16 %v591
  %v688 = vunpack.c.l.b16 %v592
  %v689 = vunpack.c.l.b16 %v593
  %v690 = vunpack.c.l.b16 %v594
  %v691 = vunpack.c.l.b16 %v595
  %v692 = vunpack.c.l.b16 %v596
  %v693 = vunpack.c.l.b16 %v597
  %v694 = vunpack.c.l.b16 %v598
  %v695 = vunpack.c.l.b16 %v599
  %v696 = vunpack.c.l.b16 %v600
  %v697 = vunpack.c.l.b16 %v601
  %v698 = vunpack.c.l.b16 %v602
  %v699 = vunpack.c.l.b16 %v603
  %v700 = vunpack.c.l.b16 %v604
  %v701 = vunpack.c.l.b16 %v605
  %v702 = vunpack.c.l.b16 %v606
  %v703 = vunpack.c.l.b16 %v607
  %v704 = vunpack.c.l.b16 %v608
  %v705 = vpack.c.b16 %v658, %v657
  %v706 = vpack.c.b16 %v660, %v659
  %v707 = vpack.c.b16 %v662, %v661
  %v708 = vpack.c.b16 %v664, %v663
  %v709 = vpack.c.b16 %v666, %v665
  %v710 = vpack.c.b16 %v668, %v667
  %v711 = vpack.c.b16 %v670, %v669
  %v712 = vpack.c.b16 %v672, %v671
  %v713 = vpack.c.b16 %v674, %v673
  %v714 = vpack.c.b16 %v676, %v675
  %v715 = vpack.c.b16 %v678, %v677
  %v716 = vpack.c.b16 %v680, %v679
  %v717 = vpack.c.b16 %v682, %v681
  %v718 = vpack.c.b16 %v684, %v683
  %v719 = vpack.c.b16 %v686, %v685
  %v720 = vpack.c.b16 %v688, %v687
  %v721 = vpack.c.b16 %v690, %v689
  %v722 = vpack.c.b16 %v692, %v691
  %v723 = vpack.c.b16 %v694, %v693
  %v724 = vpack.c.b16 %v696, %v695
  %v725 = vpack.c.b16 %v698, %v697
  %v726 = vpack.c.b16 %v700, %v699
  %v727 = vpack.c.b16 %v702, %v701
  %v728 = vpack.c.b16 %v704, %v703
  %753 = vmatprep.subr.bf16.mxu0 0
  %754 = vmatpush1.bf16.msra.mxu0 %v712
  %755 = vmatprep.subr.bf16.mxu0 0
  %756 = vmatpush1.bf16.msra.mxu0 %v711
  %757 = vmatprep.subr.bf16.mxu0 0
  %758 = vmatpush1.bf16.msra.mxu0 %v710
  %759 = vmatprep.subr.bf16.mxu0 0
  %760 = vmatpush1.bf16.msra.mxu0 %v709
  %761 = vmatprep.subr.bf16.mxu0 0
  %762 = vmatpush1.bf16.msra.mxu0 %v708
  %763 = vmatprep.subr.bf16.mxu0 0
  %764 = vmatpush1.bf16.msra.mxu0 %v707
  %765 = vmatprep.subr.bf16.mxu0 0
  %766 = vmatpush1.bf16.msra.mxu0 %v706
  %767 = vmatprep.subr.bf16.mxu0 0
  %768 = vmatpush1.bf16.msra.mxu0 %v705
  %769 = vmatprep.subr.bf16.mxu0 0
  %770 = vmatpush2.bf16.msra.mxu0 %v720
  %771 = vmatprep.subr.bf16.mxu0 0
  %772 = vmatpush2.bf16.msra.mxu0 %v719
  %773 = vmatprep.subr.bf16.mxu0 0
  %774 = vmatpush2.bf16.msra.mxu0 %v718
  %775 = vmatprep.subr.bf16.mxu0 0
  %776 = vmatpush2.bf16.msra.mxu0 %v717
  %777 = vmatprep.subr.bf16.mxu0 0
  %778 = vmatpush2.bf16.msra.mxu0 %v716
  %779 = vmatprep.subr.bf16.mxu0 0
  %780 = vmatpush2.bf16.msra.mxu0 %v715
  %781 = vmatprep.subr.bf16.mxu0 0
  %782 = vmatpush2.bf16.msra.mxu0 %v714
  %783 = vmatprep.subr.bf16.mxu0 0
  %784 = vmatpush2.bf16.msra.mxu0 %v713
  %785 = vmatprep.mubr.bf16.mxu0 %v533
  %786 = vmatmul.mubr.bf16.gmra.mxu0 %v517
  %v787 = vpop.f32.mrf.mxu0
  %v788 = vadd.f32 0.0, %v787
  %v789 = vpop.f32.mrf.mxu0
  %v790 = vpop.f32.mrf.mxu0
  %v791 = vadd.f32 0.0, %v790
  %v792 = vpop.f32.mrf.mxu0
  %793 = vmatprep.mubr.bf16.mxu0 %v545
  %794 = vmatmul.mubr.bf16.gmra.mxu0 %v518
  %v795 = vpop.f32.mrf.mxu0
  %v796 = vadd.f32 0.0, %v795
  %v797 = vpop.f32.mrf.mxu0
  %v798 = vpop.f32.mrf.mxu0
  %v799 = vadd.f32 0.0, %v798
  %v800 = vpop.f32.mrf.mxu0
  %801 = vdwg.mxu0
  %802 = vmatprep.subr.bf16.mxu0 0
  %803 = vmatpush1.bf16.msra.mxu0 %v728
  %804 = vmatprep.subr.bf16.mxu0 0
  %805 = vmatpush1.bf16.msra.mxu0 %v727
  %806 = vmatprep.subr.bf16.mxu0 0
  %807 = vmatpush1.bf16.msra.mxu0 %v726
  %808 = vmatprep.subr.bf16.mxu0 0
  %809 = vmatpush1.bf16.msra.mxu0 %v725
  %810 = vmatprep.subr.bf16.mxu0 0
  %811 = vmatpush1.bf16.msra.mxu0 %v724
  %812 = vmatprep.subr.bf16.mxu0 0
  %813 = vmatpush1.bf16.msra.mxu0 %v723
  %814 = vmatprep.subr.bf16.mxu0 0
  %815 = vmatpush1.bf16.msra.mxu0 %v722
  %816 = vmatprep.subr.bf16.mxu0 0
  %817 = vmatpush1.bf16.msra.mxu0 %v721
  %818 = vmatprep.subr.bf16.mxu0 0
  %819 = vmatpush2.bf16.msra.mxu0 0
  %820 = vmatprep.subr.bf16.mxu0 0
  %821 = vmatpush2.bf16.msra.mxu0 0
  %822 = vmatprep.subr.bf16.mxu0 0
  %823 = vmatpush2.bf16.msra.mxu0 0
  %824 = vmatprep.subr.bf16.mxu0 0
  %825 = vmatpush2.bf16.msra.mxu0 0
  %826 = vmatprep.subr.bf16.mxu0 0
  %827 = vmatpush2.bf16.msra.mxu0 0
  %828 = vmatprep.subr.bf16.mxu0 0
  %829 = vmatpush2.bf16.msra.mxu0 0
  %830 = vmatprep.subr.bf16.mxu0 0
  %831 = vmatpush2.bf16.msra.mxu0 0
  %832 = vmatprep.subr.bf16.mxu0 0
  %833 = vmatpush2.bf16.msra.mxu0 0
  %834 = vmatprep.mubr.bf16.mxu0 0
  %835 = vmatmul.mubr.bf16.gmra.mxu0 %v555
  %v836 = vpop.f32.mrf.mxu0
  %v837 = vadd.f32 %v788, %v836
  %v838 = vpop.f32.mrf.mxu0
  %v839 = vpop.f32.mrf.mxu0
  %v840 = vadd.f32 %v791, %v839
  %v841 = vpop.f32.mrf.mxu0
  %842 = vmatprep.mubr.bf16.mxu0 0
  %843 = vmatmul.mubr.bf16.gmra.mxu0 %v558
  %v844 = vpop.f32.mrf.mxu0
  %v845 = vadd.f32 %v796, %v844
  %v846 = vpop.f32.mrf.mxu0
  %v847 = vpop.f32.mrf.mxu0
  %v848 = vadd.f32 %v799, %v847
  %v849 = vpop.f32.mrf.mxu0
  %850 = vdwg.mxu0
  %v851 = vadd.f32 %v837, %v840
  %v852 = vrot.slane %v851, 4
  %v853 = vadd.f32 %v851, %v852
  %v854 = vrot.slane %v853, 2
  %v855 = vadd.f32 %v853, %v854
  %v856 = vrot.slane %v855, 1
  %v857 = vadd.f32 %v855, %v856
  %v858 = vadd.f32 %v845, %v848
  %v859 = vrot.slane %v858, 4
  %v860 = vadd.f32 %v858, %v859
  %v861 = vrot.slane %v860, 2
  %v862 = vadd.f32 %v860, %v861
  %v863 = vrot.slane %v862, 1
  %v864 = vadd.f32 %v862, %v863
  %v865 = vld [vmem:[%s8] sm:$0xff]
  %v866 = vld [vmem:[%s8 + $0x8] sm:$0xff]
  %v867 = vld [vmem:[%s8 + $0x10] sm:$0xff]
  %v868 = vld [vmem:[%s8 + $0x18] sm:$0xff]
  %v869 = vld [vmem:[%s8 + $0x20] sm:$0xff]
  %v870 = vld [vmem:[%s8 + $0x28] sm:$0xff]
  %v871 = vld [vmem:[%s8 + $0x30] sm:$0xff]
  %v872 = vld [vmem:[%s8 + $0x38] sm:$0xff]
  %v873 = vld [vmem:[%s8 + $0x40] sm:$0xff]
  %v874 = vld [vmem:[%s8 + $0x48] sm:$0xff]
  %v875 = vld [vmem:[%s8 + $0x50] sm:$0xff]
  %v876 = vld [vmem:[%s8 + $0x58] sm:$0xff]
  %v877 = vld [vmem:[%s8 + $0x60] sm:$0xff]
  %v878 = vld [vmem:[%s8 + $0x68] sm:$0xff]
  %v879 = vld [vmem:[%s8 + $0x70] sm:$0xff]
  %v880 = vld [vmem:[%s8 + $0x78] sm:$0xff]
  %v883 = vsel %vm75, %v864, %v857
  %885 = vmatprep.subr.mxu0 0.0
  %886 = vmatpush1.msra.mxu0 %v880
  %887 = vmatprep.subr.mxu0 0.0
  %888 = vmatpush1.msra.mxu0 %v879
  %889 = vmatprep.subr.mxu0 0.0
  %890 = vmatpush1.msra.mxu0 %v878
  %891 = vmatprep.subr.mxu0 0.0
  %892 = vmatpush1.msra.mxu0 %v877
  %893 = vmatprep.subr.mxu0 0.0
  %894 = vmatpush1.msra.mxu0 %v876
  %895 = vmatprep.subr.mxu0 0.0
  %896 = vmatpush1.msra.mxu0 %v875
  %897 = vmatprep.subr.mxu0 0.0
  %898 = vmatpush1.msra.mxu0 %v874
  %899 = vmatprep.subr.mxu0 0.0
  %900 = vmatpush1.msra.mxu0 %v873
  %901 = vmatprep.subr.mxu0 0.0
  %902 = vmatpush1.msra.mxu0 %v872
  %903 = vmatprep.subr.mxu0 0.0
  %904 = vmatpush1.msra.mxu0 %v871
  %905 = vmatprep.subr.mxu0 0.0
  %906 = vmatpush1.msra.mxu0 %v870
  %907 = vmatprep.subr.mxu0 0.0
  %908 = vmatpush1.msra.mxu0 %v869
  %909 = vmatprep.subr.mxu0 0.0
  %910 = vmatpush1.msra.mxu0 %v868
  %911 = vmatprep.subr.mxu0 0.0
  %912 = vmatpush1.msra.mxu0 %v867
  %913 = vmatprep.subr.mxu0 0.0
  %914 = vmatpush1.msra.mxu0 %v866
  %915 = vmatprep.subr.mxu0 0.0
  %916 = vmatpush1.msra.mxu0 %v865
  %917 = vmatprep.subr.mxu0 0.0
  %918 = vmatpush2.msra.mxu0 0.0
  %919 = vmatprep.subr.mxu0 0.0
  %920 = vmatpush2.msra.mxu0 0.0
  %921 = vmatprep.subr.mxu0 0.0
  %922 = vmatpush2.msra.mxu0 0.0
  %923 = vmatprep.subr.mxu0 0.0
  %924 = vmatpush2.msra.mxu0 0.0
  %925 = vmatprep.subr.mxu0 0.0
  %926 = vmatpush2.msra.mxu0 0.0
  %927 = vmatprep.subr.mxu0 0.0
  %928 = vmatpush2.msra.mxu0 0.0
  %929 = vmatprep.subr.mxu0 0.0
  %930 = vmatpush2.msra.mxu0 0.0
  %931 = vmatprep.subr.mxu0 0.0
  %932 = vmatpush2.msra.mxu0 0.0
  %933 = vmatprep.subr.mxu0 0.0
  %934 = vmatpush2.msra.mxu0 0.0
  %935 = vmatprep.subr.mxu0 0.0
  %936 = vmatpush2.msra.mxu0 0.0
  %937 = vmatprep.subr.mxu0 0.0
  %938 = vmatpush2.msra.mxu0 0.0
  %939 = vmatprep.subr.mxu0 0.0
  %940 = vmatpush2.msra.mxu0 0.0
  %941 = vmatprep.subr.mxu0 0.0
  %942 = vmatpush2.msra.mxu0 0.0
  %943 = vmatprep.subr.mxu0 0.0
  %944 = vmatpush2.msra.mxu0 0.0
  %945 = vmatprep.subr.mxu0 0.0
  %946 = vmatpush2.msra.mxu0 0.0
  %947 = vmatprep.subr.mxu0 0.0
  %948 = vmatpush2.msra.mxu0 0.0
  %949 = vmatprep.mubr.f32.mxu0 0.0
  %950 = vmatmul.mubr.f32.gmra.mxu0 %v883
  %v951 = vpop.f32.mrf.mxu0
  %v952 = vadd.f32 0.0, %v951
  %v953 = vpop.f32.mrf.mxu0
  %954 = vdwg.mxu0
  %v955 = vld [vmem:[%s9] sm:$0xff]
  %v956 = vld [vmem:[%s9 + $0x8] sm:$0xff]
  %v957 = vld [vmem:[%s9 + $0x10] sm:$0xff]
  %v958 = vld [vmem:[%s9 + $0x18] sm:$0xff]
  %v959 = vld [vmem:[%s9 + $0x20] sm:$0xff]
  %v960 = vld [vmem:[%s9 + $0x28] sm:$0xff]
  %v961 = vld [vmem:[%s9 + $0x30] sm:$0xff]
  %v962 = vld [vmem:[%s9 + $0x38] sm:$0xff]
  %v963 = vld [vmem:[%s9 + $0x40] sm:$0xff]
  %v964 = vld [vmem:[%s9 + $0x48] sm:$0xff]
  %v965 = vld [vmem:[%s9 + $0x50] sm:$0xff]
  %v966 = vld [vmem:[%s9 + $0x58] sm:$0xff]
  %v967 = vld [vmem:[%s9 + $0x60] sm:$0xff]
  %v968 = vld [vmem:[%s9 + $0x68] sm:$0xff]
  %v969 = vld [vmem:[%s9 + $0x70] sm:$0xff]
  %v970 = vld [vmem:[%s9 + $0x78] sm:$0xff]
  %971 = vmatprep.subr.mxu0 0.0
  %972 = vmatpush1.msra.mxu0 %v970
  %973 = vmatprep.subr.mxu0 0.0
  %974 = vmatpush1.msra.mxu0 %v969
  %975 = vmatprep.subr.mxu0 0.0
  %976 = vmatpush1.msra.mxu0 %v968
  %977 = vmatprep.subr.mxu0 0.0
  %978 = vmatpush1.msra.mxu0 %v967
  %979 = vmatprep.subr.mxu0 0.0
  %980 = vmatpush1.msra.mxu0 %v966
  %981 = vmatprep.subr.mxu0 0.0
  %982 = vmatpush1.msra.mxu0 %v965
  %983 = vmatprep.subr.mxu0 0.0
  %984 = vmatpush1.msra.mxu0 %v964
  %985 = vmatprep.subr.mxu0 0.0
  %986 = vmatpush1.msra.mxu0 %v963
  %987 = vmatprep.subr.mxu0 0.0
  %988 = vmatpush1.msra.mxu0 %v962
  %989 = vmatprep.subr.mxu0 0.0
  %990 = vmatpush1.msra.mxu0 %v961
  %991 = vmatprep.subr.mxu0 0.0
  %992 = vmatpush1.msra.mxu0 %v960
  %993 = vmatprep.subr.mxu0 0.0
  %994 = vmatpush1.msra.mxu0 %v959
  %995 = vmatprep.subr.mxu0 0.0
  %996 = vmatpush1.msra.mxu0 %v958
  %997 = vmatprep.subr.mxu0 0.0
  %998 = vmatpush1.msra.mxu0 %v957
  %999 = vmatprep.subr.mxu0 0.0
  %1000 = vmatpush1.msra.mxu0 %v956
  %1001 = vmatprep.subr.mxu0 0.0
  %1002 = vmatpush1.msra.mxu0 %v955
  %1003 = vmatprep.subr.mxu0 0.0
  %1004 = vmatpush2.msra.mxu0 0.0
  %1005 = vmatprep.subr.mxu0 0.0
  %1006 = vmatpush2.msra.mxu0 0.0
  %1007 = vmatprep.subr.mxu0 0.0
  %1008 = vmatpush2.msra.mxu0 0.0
  %1009 = vmatprep.subr.mxu0 0.0
  %1010 = vmatpush2.msra.mxu0 0.0
  %1011 = vmatprep.subr.mxu0 0.0
  %1012 = vmatpush2.msra.mxu0 0.0
  %1013 = vmatprep.subr.mxu0 0.0
  %1014 = vmatpush2.msra.mxu0 0.0
  %1015 = vmatprep.subr.mxu0 0.0
  %1016 = vmatpush2.msra.mxu0 0.0
  %1017 = vmatprep.subr.mxu0 0.0
  %1018 = vmatpush2.msra.mxu0 0.0
  %1019 = vmatprep.subr.mxu0 0.0
  %1020 = vmatpush2.msra.mxu0 0.0
  %1021 = vmatprep.subr.mxu0 0.0
  %1022 = vmatpush2.msra.mxu0 0.0
  %1023 = vmatprep.subr.mxu0 0.0
  %1024 = vmatpush2.msra.mxu0 0.0
  %1025 = vmatprep.subr.mxu0 0.0
  %1026 = vmatpush2.msra.mxu0 0.0
  %1027 = vmatprep.subr.mxu0 0.0
  %1028 = vmatpush2.msra.mxu0 0.0
  %1029 = vmatprep.subr.mxu0 0.0
  %1030 = vmatpush2.msra.mxu0 0.0
  %1031 = vmatprep.subr.mxu0 0.0
  %1032 = vmatpush2.msra.mxu0 0.0
  %1033 = vmatprep.subr.mxu0 0.0
  %1034 = vmatpush2.msra.mxu0 0.0
  %1035 = vmatprep.mubr.f32.mxu0 0.0
  %1036 = vmatmul.mubr.f32.gmra.mxu0 %v952
  %v1037 = vpop.f32.mrf.mxu0
  %v1038 = vadd.f32 0.0, %v1037
  %v1039 = vpop.f32.mrf.mxu0
  %1040 = vdwg.mxu0
  %v1043 = vunpack.c.l.s4 1966171168
  %v1044 = vunpack.c.0.s8 %v1043
  %v1045 = vlaneseq
  %v1046 = vshrl.u32 %v1045, 7
  %v1047 = vsub.s32 %v1044, %v1046
  %v1048 = vrot.slane %v1038, %v1047
  %v1049 = vcombine.high %v1048, %v1048
  %v1051 = vunpack.c.l.s4 1966171168
  %v1052 = vunpack.c.0.s8 %v1051
  %v1053 = vlaneseq
  %v1054 = vshrl.u32 %v1053, 7
  %v1055 = vsub.s32 %v1052, %v1054
  %v1056 = vrot.slane %v1048, %v1055
  %v1058 = vunpack.c.l.s4 1966171168
  %v1059 = vunpack.c.0.s8 %v1058
  %v1060 = vlaneseq
  %v1061 = vshrl.u32 %v1060, 7
  %v1062 = vsub.s32 %v1059, %v1061
  %v1063 = vrot.slane %v1049, %v1062
  %v1064 = vlaneseq
  %v1065 = vshrl.u32 %v1064, 7
  %v1066 = vsub.s32 0, %v1065
  %v1067 = vrot.slane %v1056, %v1066
  %v1068 = vlaneseq
  %v1069 = vshrl.u32 %v1068, 7
  %v1070 = vsub.s32 0, %v1069
  %v1071 = vrot.slane %v1063, %v1070
  %v1074 = vsub.f32 %v837, %v1067
  %v1075 = vsub.f32 %v840, %v1067
  %v1076 = vsub.f32 %v845, %v1071
  %v1077 = vsub.f32 %v848, %v1071
  %v1078 = vmul.f32 %v1074, %v1074
  %v1079 = vmul.f32 %v1075, %v1075
  %v1080 = vmul.f32 %v1076, %v1076
  %v1081 = vmul.f32 %v1077, %v1077
  %v1082 = vadd.f32 %v1078, %v1079
  %v1083 = vrot.slane %v1082, 4
  %v1084 = vadd.f32 %v1082, %v1083
  %v1085 = vrot.slane %v1084, 2
  %v1086 = vadd.f32 %v1084, %v1085
  %v1087 = vrot.slane %v1086, 1
  %v1088 = vadd.f32 %v1086, %v1087
  %v1089 = vadd.f32 %v1080, %v1081
  %v1090 = vrot.slane %v1089, 4
  %v1091 = vadd.f32 %v1089, %v1090
  %v1092 = vrot.slane %v1091, 2
  %v1093 = vadd.f32 %v1091, %v1092
  %v1094 = vrot.slane %v1093, 1
  %v1095 = vadd.f32 %v1093, %v1094
  %v1098 = vsel %vm75, %v1095, %v1088
  %1100 = vmatprep.subr.mxu0 0.0
  %1101 = vmatpush1.msra.mxu0 %v880
  %1102 = vmatprep.subr.mxu0 0.0
  %1103 = vmatpush1.msra.mxu0 %v879
  %1104 = vmatprep.subr.mxu0 0.0
  %1105 = vmatpush1.msra.mxu0 %v878
  %1106 = vmatprep.subr.mxu0 0.0
  %1107 = vmatpush1.msra.mxu0 %v877
  %1108 = vmatprep.subr.mxu0 0.0
  %1109 = vmatpush1.msra.mxu0 %v876
  %1110 = vmatprep.subr.mxu0 0.0
  %1111 = vmatpush1.msra.mxu0 %v875
  %1112 = vmatprep.subr.mxu0 0.0
  %1113 = vmatpush1.msra.mxu0 %v874
  %1114 = vmatprep.subr.mxu0 0.0
  %1115 = vmatpush1.msra.mxu0 %v873
  %1116 = vmatprep.subr.mxu0 0.0
  %1117 = vmatpush1.msra.mxu0 %v872
  %1118 = vmatprep.subr.mxu0 0.0
  %1119 = vmatpush1.msra.mxu0 %v871
  %1120 = vmatprep.subr.mxu0 0.0
  %1121 = vmatpush1.msra.mxu0 %v870
  %1122 = vmatprep.subr.mxu0 0.0
  %1123 = vmatpush1.msra.mxu0 %v869
  %1124 = vmatprep.subr.mxu0 0.0
  %1125 = vmatpush1.msra.mxu0 %v868
  %1126 = vmatprep.subr.mxu0 0.0
  %1127 = vmatpush1.msra.mxu0 %v867
  %1128 = vmatprep.subr.mxu0 0.0
  %1129 = vmatpush1.msra.mxu0 %v866
  %1130 = vmatprep.subr.mxu0 0.0
  %1131 = vmatpush1.msra.mxu0 %v865
  %1132 = vmatprep.subr.mxu0 0.0
  %1133 = vmatpush2.msra.mxu0 0.0
  %1134 = vmatprep.subr.mxu0 0.0
  %1135 = vmatpush2.msra.mxu0 0.0
  %1136 = vmatprep.subr.mxu0 0.0
  %1137 = vmatpush2.msra.mxu0 0.0
  %1138 = vmatprep.subr.mxu0 0.0
  %1139 = vmatpush2.msra.mxu0 0.0
  %1140 = vmatprep.subr.mxu0 0.0
  %1141 = vmatpush2.msra.mxu0 0.0
  %1142 = vmatprep.subr.mxu0 0.0
  %1143 = vmatpush2.msra.mxu0 0.0
  %1144 = vmatprep.subr.mxu0 0.0
  %1145 = vmatpush2.msra.mxu0 0.0
  %1146 = vmatprep.subr.mxu0 0.0
  %1147 = vmatpush2.msra.mxu0 0.0
  %1148 = vmatprep.subr.mxu0 0.0
  %1149 = vmatpush2.msra.mxu0 0.0
  %1150 = vmatprep.subr.mxu0 0.0
  %1151 = vmatpush2.msra.mxu0 0.0
  %1152 = vmatprep.subr.mxu0 0.0
  %1153 = vmatpush2.msra.mxu0 0.0
  %1154 = vmatprep.subr.mxu0 0.0
  %1155 = vmatpush2.msra.mxu0 0.0
  %1156 = vmatprep.subr.mxu0 0.0
  %1157 = vmatpush2.msra.mxu0 0.0
  %1158 = vmatprep.subr.mxu0 0.0
  %1159 = vmatpush2.msra.mxu0 0.0
  %1160 = vmatprep.subr.mxu0 0.0
  %1161 = vmatpush2.msra.mxu0 0.0
  %1162 = vmatprep.subr.mxu0 0.0
  %1163 = vmatpush2.msra.mxu0 0.0
  %1164 = vmatprep.mubr.f32.mxu0 0.0
  %1165 = vmatmul.mubr.f32.gmra.mxu0 %v1098
  %v1166 = vpop.f32.mrf.mxu0
  %v1167 = vadd.f32 0.0, %v1166
  %v1168 = vpop.f32.mrf.mxu0
  %1169 = vdwg.mxu0
  %1170 = vmatprep.subr.mxu0 0.0
  %1171 = vmatpush1.msra.mxu0 %v970
  %1172 = vmatprep.subr.mxu0 0.0
  %1173 = vmatpush1.msra.mxu0 %v969
  %1174 = vmatprep.subr.mxu0 0.0
  %1175 = vmatpush1.msra.mxu0 %v968
  %1176 = vmatprep.subr.mxu0 0.0
  %1177 = vmatpush1.msra.mxu0 %v967
  %1178 = vmatprep.subr.mxu0 0.0
  %1179 = vmatpush1.msra.mxu0 %v966
  %1180 = vmatprep.subr.mxu0 0.0
  %1181 = vmatpush1.msra.mxu0 %v965
  %1182 = vmatprep.subr.mxu0 0.0
  %1183 = vmatpush1.msra.mxu0 %v964
  %1184 = vmatprep.subr.mxu0 0.0
  %1185 = vmatpush1.msra.mxu0 %v963
  %1186 = vmatprep.subr.mxu0 0.0
  %1187 = vmatpush1.msra.mxu0 %v962
  %1188 = vmatprep.subr.mxu0 0.0
  %1189 = vmatpush1.msra.mxu0 %v961
  %1190 = vmatprep.subr.mxu0 0.0
  %1191 = vmatpush1.msra.mxu0 %v960
  %1192 = vmatprep.subr.mxu0 0.0
  %1193 = vmatpush1.msra.mxu0 %v959
  %1194 = vmatprep.subr.mxu0 0.0
  %1195 = vmatpush1.msra.mxu0 %v958
  %1196 = vmatprep.subr.mxu0 0.0
  %1197 = vmatpush1.msra.mxu0 %v957
  %1198 = vmatprep.subr.mxu0 0.0
  %1199 = vmatpush1.msra.mxu0 %v956
  %1200 = vmatprep.subr.mxu0 0.0
  %1201 = vmatpush1.msra.mxu0 %v955
  %1202 = vmatprep.subr.mxu0 0.0
  %1203 = vmatpush2.msra.mxu0 0.0
  %1204 = vmatprep.subr.mxu0 0.0
  %1205 = vmatpush2.msra.mxu0 0.0
  %1206 = vmatprep.subr.mxu0 0.0
  %1207 = vmatpush2.msra.mxu0 0.0
  %1208 = vmatprep.subr.mxu0 0.0
  %1209 = vmatpush2.msra.mxu0 0.0
  %1210 = vmatprep.subr.mxu0 0.0
  %1211 = vmatpush2.msra.mxu0 0.0
  %1212 = vmatprep.subr.mxu0 0.0
  %1213 = vmatpush2.msra.mxu0 0.0
  %1214 = vmatprep.subr.mxu0 0.0
  %1215 = vmatpush2.msra.mxu0 0.0
  %1216 = vmatprep.subr.mxu0 0.0
  %1217 = vmatpush2.msra.mxu0 0.0
  %1218 = vmatprep.subr.mxu0 0.0
  %1219 = vmatpush2.msra.mxu0 0.0
  %1220 = vmatprep.subr.mxu0 0.0
  %1221 = vmatpush2.msra.mxu0 0.0
  %1222 = vmatprep.subr.mxu0 0.0
  %1223 = vmatpush2.msra.mxu0 0.0
  %1224 = vmatprep.subr.mxu0 0.0
  %1225 = vmatpush2.msra.mxu0 0.0
  %1226 = vmatprep.subr.mxu0 0.0
  %1227 = vmatpush2.msra.mxu0 0.0
  %1228 = vmatprep.subr.mxu0 0.0
  %1229 = vmatpush2.msra.mxu0 0.0
  %1230 = vmatprep.subr.mxu0 0.0
  %1231 = vmatpush2.msra.mxu0 0.0
  %1232 = vmatprep.subr.mxu0 0.0
  %1233 = vmatpush2.msra.mxu0 0.0
  %1234 = vmatprep.mubr.f32.mxu0 0.0
  %1235 = vmatmul.mubr.f32.gmra.mxu0 %v1167
  %v1236 = vpop.f32.mrf.mxu0
  %v1237 = vadd.f32 1e-05, %v1236
  %v1238 = vpop.f32.mrf.mxu0
  %1239 = vdwg.mxu0
  %v1240 = vrsqrt.pop %v1237
  %v1241 = vld [vmem:[%s6] sm:$0x1]
  %v1243 = vlaneseq
  %v1244 = vshrl.u32 %v1243, 7
  %v1245 = vsub.s32 0, %v1244
  %v1246 = vrot.slane %v1241, %v1245
  %v1248 = vmul.f32 %v1240, %v1246
  %v1251 = vunpack.c.l.s4 1966171168
  %v1252 = vunpack.c.0.s8 %v1251
  %v1253 = vlaneseq
  %v1254 = vshrl.u32 %v1253, 7
  %v1255 = vsub.s32 %v1252, %v1254
  %v1256 = vrot.slane %v1248, %v1255
  %v1257 = vcombine.high %v1256, %v1256
  %v1259 = vunpack.c.l.s4 1966171168
  %v1260 = vunpack.c.0.s8 %v1259
  %v1261 = vlaneseq
  %v1262 = vshrl.u32 %v1261, 7
  %v1263 = vsub.s32 %v1260, %v1262
  %v1264 = vrot.slane %v1256, %v1263
  %v1266 = vunpack.c.l.s4 1966171168
  %v1267 = vunpack.c.0.s8 %v1266
  %v1268 = vlaneseq
  %v1269 = vshrl.u32 %v1268, 7
  %v1270 = vsub.s32 %v1267, %v1269
  %v1271 = vrot.slane %v1257, %v1270
  %v1272 = vlaneseq
  %v1273 = vshrl.u32 %v1272, 7
  %v1274 = vsub.s32 0, %v1273
  %v1275 = vrot.slane %v1264, %v1274
  %v1276 = vlaneseq
  %v1277 = vshrl.u32 %v1276, 7
  %v1278 = vsub.s32 0, %v1277
  %v1279 = vrot.slane %v1271, %v1278
  %v1282 = vmul.f32 %v1074, %v1275
  %v1283 = vmul.f32 %v1075, %v1275
  %v1284 = vmul.f32 %v1076, %v1279
  %v1285 = vmul.f32 %v1077, %v1279
  %v1286 = vld [vmem:[%s7] sm:$0x1]
  %v1288 = vlaneseq
  %v1289 = vshrl.u32 %v1288, 7
  %v1290 = vsub.s32 0, %v1289
  %v1291 = vrot.slane %v1286, %v1290
  %v1293 = vadd.f32 %v1282, %v1291
  %v1294 = vadd.f32 %v1283, %v1291
  %v1295 = vadd.f32 %v1284, %v1291
  %v1296 = vadd.f32 %v1285, %v1291
  %v1297 = vmax.f32 %v1293, 0.0
  %v1298 = vmax.f32 %v1294, 0.0
  %v1299 = vmax.f32 %v1295, 0.0
  %v1300 = vmax.f32 %v1296, 0.0
  %v1301 = vpack.c.bf16 %v1298, %v1297
  %v1302 = vpack.c.bf16 %v1300, %v1299
  %v1303 = vld [vmem:[%s10] sm:$0xf]
  %v1304 = vld [vmem:[%s10 + $0x4] sm:$0xf]
  %v1305 = vld [vmem:[%s10 + $0x8] sm:$0xf]
  %v1306 = vld [vmem:[%s10 + $0xc] sm:$0xf]
  %v1307 = vld [vmem:[%s10 + $0x10] sm:$0xf]
  %v1308 = vld [vmem:[%s10 + $0x14] sm:$0xf]
  %v1309 = vld [vmem:[%s10 + $0x18] sm:$0xf]
  %v1310 = vld [vmem:[%s10 + $0x1c] sm:$0xf]
  %v1311 = vld [vmem:[%s10 + $0x20] sm:$0xf]
  %v1312 = vld [vmem:[%s10 + $0x24] sm:$0xf]
  %v1313 = vld [vmem:[%s10 + $0x28] sm:$0xf]
  %v1314 = vld [vmem:[%s10 + $0x2c] sm:$0xf]
  %v1315 = vld [vmem:[%s10 + $0x30] sm:$0xf]
  %v1316 = vld [vmem:[%s10 + $0x34] sm:$0xf]
  %v1317 = vld [vmem:[%s10 + $0x38] sm:$0xf]
  %v1318 = vld [vmem:[%s10 + $0x3c] sm:$0xf]
  %v1335 = vunpack.c.l.b16 %v1303
  %v1336 = vunpack.c.l.b16 %v1304
  %v1337 = vunpack.c.l.b16 %v1305
  %v1338 = vunpack.c.l.b16 %v1306
  %v1339 = vunpack.c.l.b16 %v1307
  %v1340 = vunpack.c.l.b16 %v1308
  %v1341 = vunpack.c.l.b16 %v1309
  %v1342 = vunpack.c.l.b16 %v1310
  %v1343 = vunpack.c.l.b16 %v1311
  %v1344 = vunpack.c.l.b16 %v1312
  %v1345 = vunpack.c.l.b16 %v1313
  %v1346 = vunpack.c.l.b16 %v1314
  %v1347 = vunpack.c.l.b16 %v1315
  %v1348 = vunpack.c.l.b16 %v1316
  %v1349 = vunpack.c.l.b16 %v1317
  %v1350 = vunpack.c.l.b16 %v1318
  %v1351 = vpack.c.b16 %v1336, %v1335
  %v1352 = vpack.c.b16 %v1338, %v1337
  %v1353 = vpack.c.b16 %v1340, %v1339
  %v1354 = vpack.c.b16 %v1342, %v1341
  %v1355 = vpack.c.b16 %v1344, %v1343
  %v1356 = vpack.c.b16 %v1346, %v1345
  %v1357 = vpack.c.b16 %v1348, %v1347
  %v1358 = vpack.c.b16 %v1350, %v1349
  %1367 = vmatprep.subr.bf16.mxu0 0
  %1368 = vmatpush1.bf16.msra.mxu0 %v1358
  %1369 = vmatprep.subr.bf16.mxu0 0
  %1370 = vmatpush1.bf16.msra.mxu0 %v1357
  %1371 = vmatprep.subr.bf16.mxu0 0
  %1372 = vmatpush1.bf16.msra.mxu0 %v1356
  %1373 = vmatprep.subr.bf16.mxu0 0
  %1374 = vmatpush1.bf16.msra.mxu0 %v1355
  %1375 = vmatprep.subr.bf16.mxu0 0
  %1376 = vmatpush1.bf16.msra.mxu0 %v1354
  %1377 = vmatprep.subr.bf16.mxu0 0
  %1378 = vmatpush1.bf16.msra.mxu0 %v1353
  %1379 = vmatprep.subr.bf16.mxu0 0
  %1380 = vmatpush1.bf16.msra.mxu0 %v1352
  %1381 = vmatprep.subr.bf16.mxu0 0
  %1382 = vmatpush1.bf16.msra.mxu0 %v1351
  %1383 = vmatprep.subr.bf16.mxu0 0
  %1384 = vmatpush2.bf16.msra.mxu0 0
  %1385 = vmatprep.subr.bf16.mxu0 0
  %1386 = vmatpush2.bf16.msra.mxu0 0
  %1387 = vmatprep.subr.bf16.mxu0 0
  %1388 = vmatpush2.bf16.msra.mxu0 0
  %1389 = vmatprep.subr.bf16.mxu0 0
  %1390 = vmatpush2.bf16.msra.mxu0 0
  %1391 = vmatprep.subr.bf16.mxu0 0
  %1392 = vmatpush2.bf16.msra.mxu0 0
  %1393 = vmatprep.subr.bf16.mxu0 0
  %1394 = vmatpush2.bf16.msra.mxu0 0
  %1395 = vmatprep.subr.bf16.mxu0 0
  %1396 = vmatpush2.bf16.msra.mxu0 0
  %1397 = vmatprep.subr.bf16.mxu0 0
  %1398 = vmatpush2.bf16.msra.mxu0 0
  %1399 = vmatprep.mubr.bf16.mxu0 0
  %1400 = vmatmul.mubr.bf16.gmra.mxu0 %v1301
  %v1401 = vpop.f32.mrf.mxu0
  %v1402 = vadd.f32 0.0, %v1401
  %v1403 = vpop.f32.mrf.mxu0
  %v1404 = vpop.f32.mrf.mxu0
  %v1405 = vadd.f32 0.0, %v1404
  %v1406 = vpop.f32.mrf.mxu0
  %1407 = vmatprep.mubr.bf16.mxu0 0
  %1408 = vmatmul.mubr.bf16.gmra.mxu0 %v1302
  %v1409 = vpop.f32.mrf.mxu0
  %v1410 = vadd.f32 0.0, %v1409
  %v1411 = vpop.f32.mrf.mxu0
  %v1412 = vpop.f32.mrf.mxu0
  %v1413 = vadd.f32 0.0, %v1412
  %v1414 = vpop.f32.mrf.mxu0
  %1415 = vdwg.mxu0
  %v1416 = vadd.f32 %v1402, %v39
  %v1417 = vadd.f32 %v1405, %v40
  %v1418 = vadd.f32 %v1410, %v41
  %v1419 = vadd.f32 %v1413, %v42
  %1420 = vst [vmem:[%s11] sm:$0xff] %v1416
  %1421 = vst [vmem:[%s11 + $0x8] sm:$0xff] %v1417
  %1422 = vst [vmem:[%s11 + $0x10] sm:$0xff] %v1418
  %1423 = vst [vmem:[%s11 + $0x18] sm:$0xff] %v1419
  // Predicated region
  $region46: #{improved_residual_block_forward.1} parent=0 // pred_check
    _
  $region47: #{improved_residual_block_forward.1} parent=0 // pred_check_branch
    %1425 = sbr.rel (0) target = $region49
  $region48: #{improved_residual_block_forward.1} parent=0 // pred_region
    _
  $region49: #{improved_residual_block_forward.1} parent=0 // pred_fallthru
    _
  // Predicated region
  $region50: #{improved_residual_block_forward.1} parent=0 // pred_check
    _
  $region51: #{improved_residual_block_forward.1} parent=0 // pred_check_branch
    %1427 = sbr.rel (0) target = $region53
  $region52: #{improved_residual_block_forward.1} parent=0 // pred_region
    _
  $region53: #{improved_residual_block_forward.1} parent=0 // pred_fallthru
    _

</llo_original>
